<compile_context>
chip_gen: v5e
topology: v5e:2x2
jax: 0.10.0
libtpu: 0.0.40
codegen_flags: <defaults>
</compile_context>

<pallas_src>
import jax
import jax.numpy as jnp
from jax.experimental import pallas as pl
from jax.experimental.pallas import tpu as pltpu

HIDDEN = 32  # nn.LSTM(32, 32, 2, bidirectional=True)


# ----------------------------- fused kernel -----------------------------
def _make_fused_kernel(T, BP, B, H, V):
    """T timesteps, BP padded batch rows (multiple of 8), B real batch, H hidden, V vocab."""

    def kernel(tok_ref, emb_ref,
               wih1_cat, b1_cat, whh_f1, whh_b1,
               wih2_top, wih2_bot, b2_cat, whh_f2,
               fc1w, fc1b, fc2w, fc2b,
               out_ref):

        def lstm_scan(pre, whh_ref, reverse):
            # pre: (T*BP, 4H) hoisted, time-major input projection (b_ih + b_hh included).
            # Fully unrolled: the serial critical path per step is one (BP,H)x(H,4H) MXU
            # matmul plus one sigmoid / two tanh EUP passes and a handful of VPU ops.
            h = jnp.zeros((BP, H), jnp.float32)
            c = jnp.zeros((BP, H), jnp.float32)
            whh = whh_ref[...]
            ys = [None] * T
            for s in range(T):
                t = (T - 1 - s) if reverse else s
                gates = pre[t * BP:(t + 1) * BP, :] + jnp.dot(
                    h, whh, preferred_element_type=jnp.float32)          # (BP, 4H)
                sig = jax.nn.sigmoid(gates)                              # full-vreg EUP pass
                tnh = jnp.tanh(gates)                                    # full-vreg EUP pass
                i = sig[:, 0 * H:1 * H]                                  # PyTorch gate order
                f = sig[:, 1 * H:2 * H]                                  # i, f, g, o
                g = tnh[:, 2 * H:3 * H]
                o = sig[:, 3 * H:4 * H]
                c = f * c + i * g
                h = o * jnp.tanh(c)
                ys[t] = h
            return ys, h

        # ---- embedding lookup as a one-hot matmul (gather stays in-kernel, exact) ----
        tok = tok_ref[...]                                               # (T*BP, 1) int32
        vocab_iota = jax.lax.broadcasted_iota(jnp.int32, (T * BP, V), 1)
        onehot = (vocab_iota == tok).astype(jnp.float32)                 # (T*BP, V)
        x1 = jnp.dot(onehot, emb_ref[...],
                     preferred_element_type=jnp.float32)                 # (T*BP, H)

        # ---- layer 1: both directions' input projections in ONE hoisted matmul ----
        pre1 = jnp.dot(x1, wih1_cat[...],
                       preferred_element_type=jnp.float32) + b1_cat[...]  # (T*BP, 8H)
        pre_f1 = pre1[:, 0 * H:4 * H]                                     # 128-lane aligned
        pre_b1 = pre1[:, 4 * H:8 * H]
        ys_f1, _ = lstm_scan(pre_f1, whh_f1, reverse=False)
        ys_b1, _ = lstm_scan(pre_b1, whh_b1, reverse=True)

        f1 = jnp.concatenate(ys_f1, axis=0)                              # (T*BP, H)
        b1 = jnp.concatenate(ys_b1, axis=0)                              # (T*BP, H)

        # ---- layer 2: fwd + (truncated) bwd input projections in ONE fused matmul.
        # W_ih rows are pre-split per layer-1 half so no lane-axis feature concat is needed.
        pre2 = (jnp.dot(f1, wih2_top[...], preferred_element_type=jnp.float32)
                + jnp.dot(b1, wih2_bot[...], preferred_element_type=jnp.float32)
                + b2_cat[...])                                           # (T*BP, 8H)
        pre_f2 = pre2[:, 0 * H:4 * H]
        _, h_f2 = lstm_scan(pre_f2, whh_f2, reverse=False)               # (BP, H)

        # ---- layer 2 backward, truncated to its first step (t = T-1) ----
        # The model reads only x[:, -1, :]; the backward hidden there is exactly the
        # first step of the reverse pass with h0 = c0 = 0 (so the W_hh term is zero).
        g2 = pre2[(T - 1) * BP:T * BP, 4 * H:8 * H]                       # (BP, 4H)
        sig2 = jax.nn.sigmoid(g2)
        tnh2 = jnp.tanh(g2)
        i2 = sig2[:, 0 * H:1 * H]
        gg2 = tnh2[:, 2 * H:3 * H]
        o2 = sig2[:, 3 * H:4 * H]
        c2 = i2 * gg2                                                    # f * c0 == 0
        h_b2 = o2 * jnp.tanh(c2)                                         # (BP, H)

        # ---- fc1 + relu + fc2 (fc1 rows split so no lane-axis concat needed) ----
        z = (jnp.dot(h_f2, fc1w[0:H, :], preferred_element_type=jnp.float32)
             + jnp.dot(h_b2, fc1w[H:2 * H, :], preferred_element_type=jnp.float32)
             + fc1b[...])
        z = jnp.maximum(z, 0.0)
        logits = jnp.dot(z, fc2w[...], preferred_element_type=jnp.float32) + fc2b[...]
        out_ref[...] = logits[0:B, :]                                    # drop padded rows

    return kernel


# ----------------------------- parameters -----------------------------
def init_params(key, n_vocab, hidden=HIDDEN):
    """Deterministic parameters in PyTorch layouts (nn.Embedding / nn.LSTM / nn.Linear)."""
    def u(k, shape, scale):
        return jax.random.uniform(k, shape, jnp.float32, -scale, scale)

    keys = iter(jax.random.split(key, 64))
    params = {"embedding": jax.random.normal(next(keys), (n_vocab, hidden), jnp.float32)}

    s = 1.0 / float(hidden) ** 0.5
    for layer in range(2):
        d_in = hidden if layer == 0 else 2 * hidden
        for direction in ("fwd", "bwd"):
            params[f"lstm_l{layer}_{direction}"] = (
                u(next(keys), (4 * hidden, d_in), s),     # w_ih
                u(next(keys), (4 * hidden, hidden), s),   # w_hh
                u(next(keys), (4 * hidden,), s),          # b_ih
                u(next(keys), (4 * hidden,), s),          # b_hh
            )

    s1 = 1.0 / float(2 * hidden) ** 0.5
    params["fc1_w"] = u(next(keys), (2 * hidden, 2 * hidden), s1)
    params["fc1_b"] = u(next(keys), (2 * hidden,), s1)
    params["fc2_w"] = u(next(keys), (n_vocab, 2 * hidden), s1)
    params["fc2_b"] = u(next(keys), (n_vocab,), s1)
    return params


def pack_params(params, hidden=HIDDEN):
    """One-time conversion from PyTorch layout to kernel layout: (in,out) weights,
    fused b_ih+b_hh biases, and lane-concatenated per-direction input projections.
    Done outside the jitted forward so the forward is a single kernel launch."""
    H = hidden
    f32 = lambda a: jnp.asarray(a, jnp.float32)

    def lstm_parts(layer, direction):
        w_ih, w_hh, b_ih, b_hh = params[f"lstm_l{layer}_{direction}"]
        return f32(w_ih).T, f32(w_hh).T, (f32(b_ih) + f32(b_hh)).reshape(1, 4 * H)

    wih_f1, whh_f1, b_f1 = lstm_parts(0, "fwd")
    wih_b1, whh_b1, b_b1 = lstm_parts(0, "bwd")
    wih_f2, whh_f2, b_f2 = lstm_parts(1, "fwd")
    wih_b2, _whh_b2, b_b2 = lstm_parts(1, "bwd")   # W_hh_l1_reverse unused (1-step truncation, h0=0)

    # Lane-concatenate the two directions so each layer's hoisted input projection is a
    # single matmul; splits in-kernel fall exactly on the 128-lane vreg boundary.
    wih1_cat = jnp.concatenate([wih_f1, wih_b1], axis=1)                        # (H, 8H)
    b1_cat = jnp.concatenate([b_f1, b_b1], axis=1)                              # (1, 8H)
    wih2_top = jnp.concatenate([wih_f2[0:H, :], wih_b2[0:H, :]], axis=1)        # (H, 8H)
    wih2_bot = jnp.concatenate([wih_f2[H:2 * H, :], wih_b2[H:2 * H, :]], axis=1)
    b2_cat = jnp.concatenate([b_f2, b_b2], axis=1)                              # (1, 8H)

    packed = (f32(params["embedding"]),
              wih1_cat, b1_cat, whh_f1, whh_b1,
              wih2_top, wih2_bot, b2_cat, whh_f2,
              f32(params["fc1_w"]).T, f32(params["fc1_b"]).reshape(1, -1),
              f32(params["fc2_w"]).T, f32(params["fc2_b"]).reshape(1, -1))
    return packed


# ----------------------------- forward -----------------------------
def leonard_bilstm_forward(tokens, packed):
    """tokens: (B, T) int32 ids. packed: pack_params(...) output. Returns (B, n_vocab) f32."""
    B, T = tokens.shape
    V, H = packed[0].shape
    BP = ((B + 7) // 8) * 8                                   # pad batch to a full sublane tile
    tok_pad = jnp.zeros((BP, T), jnp.int32).at[:B, :].set(tokens.astype(jnp.int32))
    tok_tm = jnp.transpose(tok_pad).reshape(T * BP, 1)        # time-major, flat

    return pl.pallas_call(
        _make_fused_kernel(T, BP, B, H, V),
        out_shape=jax.ShapeDtypeStruct((B, V), jnp.float32),
        in_specs=[pl.BlockSpec(memory_space=pltpu.MemorySpace.VMEM)] * (1 + len(packed)),
        out_specs=pl.BlockSpec(memory_space=pltpu.MemorySpace.VMEM),
    )(tok_tm, *packed)


# ----------------------------- pure-JAX reference (validation only) -----------------------------
def _ref_forward(tokens, params, hidden=HIDDEN):
    H = hidden
    x = jnp.take(jnp.asarray(params["embedding"], jnp.float32), tokens, axis=0)  # (B,T,H)

    def direction(x_btd, w_ih, w_hh, b_ih, b_hh, reverse):
        Bb = x_btd.shape[0]
        xs = jnp.swapaxes(x_btd, 0, 1)                        # (T,B,D)
        if reverse:
            xs = xs[::-1]

        def step(carry, x_t):
            h, c = carry
            gates = x_t @ w_ih.T + b_ih + h @ w_hh.T + b_hh
            i = jax.nn.sigmoid(gates[:, 0 * H:1 * H])
            f = jax.nn.sigmoid(gates[:, 1 * H:2 * H])
            g = jnp.tanh(gates[:, 2 * H:3 * H])
            o = jax.nn.sigmoid(gates[:, 3 * H:4 * H])
            c = f * c + i * g
            h = o * jnp.tanh(c)
            return (h, c), h

        init = (jnp.zeros((Bb, H), jnp.float32), jnp.zeros((Bb, H), jnp.float32))
        _, ys = jax.lax.scan(step, init, xs)
        if reverse:
            ys = ys[::-1]
        return jnp.swapaxes(ys, 0, 1)                         # (B,T,H)

    for layer in range(2):
        fwd = direction(x, *params[f"lstm_l{layer}_fwd"], reverse=False)
        bwd = direction(x, *params[f"lstm_l{layer}_bwd"], reverse=True)
        x = jnp.concatenate([fwd, bwd], axis=-1)
    h_last = x[:, -1, :]
    z = jnp.maximum(h_last @ params["fc1_w"].T + params["fc1_b"], 0.0)
    return z @ params["fc2_w"].T + params["fc2_b"]


if __name__ == "__main__":
    n_vocab = 64
    batch, seq = 2, 8

    key = jax.random.PRNGKey(0)
    k_tok, k_param = jax.random.split(key)
    tokens = jax.random.randint(k_tok, (batch, seq), 0, n_vocab, dtype=jnp.int32)
    params = init_params(k_param, n_vocab)
    packed = pack_params(params)

    forward = jax.jit(leonard_bilstm_forward)
    logits = forward(tokens, packed)
    jax.block_until_ready(logits)
    assert logits.shape == (batch, n_vocab), logits.shape

    # validate the fused kernel against a pure-JAX reference of the PyTorch module
    ref = _ref_forward(tokens, params)
    max_err = float(jnp.max(jnp.abs(logits - ref)))
    assert jnp.allclose(logits, ref, atol=1e-3, rtol=1e-3), max_err

    print("KERNEL_OK")
</pallas_src>

<mosaic_0001>
module attributes {stable_mosaic.version = 11 : i64} {
  func.func @kernel(%arg0: memref<64x1xi32, #tpu.memory_space<vmem>>, %arg1: memref<64x32xf32, #tpu.memory_space<vmem>>, %arg2: memref<32x256xf32, #tpu.memory_space<vmem>>, %arg3: memref<1x256xf32, #tpu.memory_space<vmem>>, %arg4: memref<32x128xf32, #tpu.memory_space<vmem>>, %arg5: memref<32x128xf32, #tpu.memory_space<vmem>>, %arg6: memref<32x256xf32, #tpu.memory_space<vmem>>, %arg7: memref<32x256xf32, #tpu.memory_space<vmem>>, %arg8: memref<1x256xf32, #tpu.memory_space<vmem>>, %arg9: memref<32x128xf32, #tpu.memory_space<vmem>>, %arg10: memref<64x64xf32, #tpu.memory_space<vmem>>, %arg11: memref<1x64xf32, #tpu.memory_space<vmem>>, %arg12: memref<64x64xf32, #tpu.memory_space<vmem>>, %arg13: memref<1x64xf32, #tpu.memory_space<vmem>>, %arg14: memref<2x64xf32, #tpu.memory_space<vmem>>) attributes {dimension_semantics = [], scalar_prefetch = 0 : i64, scratch_operands = 0 : i64, tpu.core_type = #tpu.core_type<tc>} {
    %c0 = arith.constant 0 : index
    %c0_0 = arith.constant 0 : index
    %0 = vector.load %arg0[%c0, %c0_0] : memref<64x1xi32, #tpu.memory_space<vmem>>, vector<64x1xi32>
    %1 = tpu.iota {dimensions = array<i32: 1>} : vector<64x64xi32>
    %2 = vector.broadcast %0 : vector<64x1xi32> to vector<64x64xi32>
    %3 = arith.cmpi eq, %1, %2 : vector<64x64xi32>
    %4 = arith.extui %3 : vector<64x64xi1> to vector<64x64xi32>
    %5 = arith.sitofp %4 : vector<64x64xi32> to vector<64x64xf32>
    %c0_1 = arith.constant 0 : index
    %c0_2 = arith.constant 0 : index
    %6 = vector.load %arg1[%c0_1, %c0_2] : memref<64x32xf32, #tpu.memory_space<vmem>>, vector<64x32xf32>
    %cst = arith.constant dense<0.000000e+00> : vector<64x32xf32>
    %7 = tpu.matmul %5, %6, %cst {dimension_numbers = #tpu.dot_dimension_numbers<[1], [0], [0], [1], [0, 0, 1, 1], [], []>} : vector<64x64xf32>, vector<64x32xf32>, vector<64x32xf32> -> vector<64x32xf32>
    %c0_3 = arith.constant 0 : index
    %c0_4 = arith.constant 0 : index
    %8 = vector.load %arg2[%c0_3, %c0_4] : memref<32x256xf32, #tpu.memory_space<vmem>>, vector<32x256xf32>
    %cst_5 = arith.constant dense<0.000000e+00> : vector<64x256xf32>
    %9 = tpu.matmul %7, %8, %cst_5 {dimension_numbers = #tpu.dot_dimension_numbers<[1], [0], [0], [1], [0, 0, 1, 1], [], []>} : vector<64x32xf32>, vector<32x256xf32>, vector<64x256xf32> -> vector<64x256xf32>
    %c0_6 = arith.constant 0 : index
    %c0_7 = arith.constant 0 : index
    %10 = vector.load %arg3[%c0_6, %c0_7] : memref<1x256xf32, #tpu.memory_space<vmem>>, vector<1x256xf32>
    %11 = vector.broadcast %10 : vector<1x256xf32> to vector<64x256xf32>
    %12 = arith.addf %9, %11 : vector<64x256xf32>
    %13 = vector.extract_strided_slice %12 {offsets = [0, 0], sizes = [64, 128], strides = [1, 1]} : vector<64x256xf32> to vector<64x128xf32>
    %14 = vector.extract_strided_slice %12 {offsets = [0, 128], sizes = [64, 128], strides = [1, 1]} : vector<64x256xf32> to vector<64x128xf32>
    %cst_8 = arith.constant 0.000000e+00 : f32
    %15 = vector.broadcast %cst_8 : f32 to vector<8x32xf32>
    %cst_9 = arith.constant 0.000000e+00 : f32
    %16 = vector.broadcast %cst_9 : f32 to vector<8x32xf32>
    %c0_10 = arith.constant 0 : index
    %c0_11 = arith.constant 0 : index
    %17 = vector.load %arg4[%c0_10, %c0_11] : memref<32x128xf32, #tpu.memory_space<vmem>>, vector<32x128xf32>
    %18 = vector.extract_strided_slice %13 {offsets = [0, 0], sizes = [8, 128], strides = [1, 1]} : vector<64x128xf32> to vector<8x128xf32>
    %cst_12 = arith.constant dense<0.000000e+00> : vector<8x128xf32>
    %19 = tpu.matmul %15, %17, %cst_12 {dimension_numbers = #tpu.dot_dimension_numbers<[1], [0], [0], [1], [0, 0, 1, 1], [], []>} : vector<8x32xf32>, vector<32x128xf32>, vector<8x128xf32> -> vector<8x128xf32>
    %20 = arith.addf %18, %19 : vector<8x128xf32>
    %21 = arith.negf %20 : vector<8x128xf32>
    %22 = math.exp %21 : vector<8x128xf32>
    %cst_13 = arith.constant 1.000000e+00 : f32
    %23 = vector.broadcast %cst_13 : f32 to vector<8x128xf32>
    %24 = arith.addf %23, %22 : vector<8x128xf32>
    %25 = arith.divf %23, %24 : vector<8x128xf32>
    %26 = math.tanh %20 : vector<8x128xf32>
    %27 = vector.extract_strided_slice %25 {offsets = [0, 0], sizes = [8, 32], strides = [1, 1]} : vector<8x128xf32> to vector<8x32xf32>
    %28 = vector.extract_strided_slice %25 {offsets = [0, 32], sizes = [8, 32], strides = [1, 1]} : vector<8x128xf32> to vector<8x32xf32>
    %29 = vector.extract_strided_slice %26 {offsets = [0, 64], sizes = [8, 32], strides = [1, 1]} : vector<8x128xf32> to vector<8x32xf32>
    %30 = vector.extract_strided_slice %25 {offsets = [0, 96], sizes = [8, 32], strides = [1, 1]} : vector<8x128xf32> to vector<8x32xf32>
    %31 = arith.mulf %28, %16 : vector<8x32xf32>
    %32 = arith.mulf %27, %29 : vector<8x32xf32>
    %33 = arith.addf %31, %32 : vector<8x32xf32>
    %34 = math.tanh %33 : vector<8x32xf32>
    %35 = arith.mulf %30, %34 : vector<8x32xf32>
    %36 = vector.extract_strided_slice %13 {offsets = [8, 0], sizes = [8, 128], strides = [1, 1]} : vector<64x128xf32> to vector<8x128xf32>
    %cst_14 = arith.constant dense<0.000000e+00> : vector<8x128xf32>
    %37 = tpu.matmul %35, %17, %cst_14 {dimension_numbers = #tpu.dot_dimension_numbers<[1], [0], [0], [1], [0, 0, 1, 1], [], []>} : vector<8x32xf32>, vector<32x128xf32>, vector<8x128xf32> -> vector<8x128xf32>
    %38 = arith.addf %36, %37 : vector<8x128xf32>
    %39 = arith.negf %38 : vector<8x128xf32>
    %40 = math.exp %39 : vector<8x128xf32>
    %cst_15 = arith.constant 1.000000e+00 : f32
    %41 = vector.broadcast %cst_15 : f32 to vector<8x128xf32>
    %42 = arith.addf %41, %40 : vector<8x128xf32>
    %43 = arith.divf %41, %42 : vector<8x128xf32>
    %44 = math.tanh %38 : vector<8x128xf32>
    %45 = vector.extract_strided_slice %43 {offsets = [0, 0], sizes = [8, 32], strides = [1, 1]} : vector<8x128xf32> to vector<8x32xf32>
    %46 = vector.extract_strided_slice %43 {offsets = [0, 32], sizes = [8, 32], strides = [1, 1]} : vector<8x128xf32> to vector<8x32xf32>
    %47 = vector.extract_strided_slice %44 {offsets = [0, 64], sizes = [8, 32], strides = [1, 1]} : vector<8x128xf32> to vector<8x32xf32>
    %48 = vector.extract_strided_slice %43 {offsets = [0, 96], sizes = [8, 32], strides = [1, 1]} : vector<8x128xf32> to vector<8x32xf32>
    %49 = arith.mulf %46, %33 : vector<8x32xf32>
    %50 = arith.mulf %45, %47 : vector<8x32xf32>
    %51 = arith.addf %49, %50 : vector<8x32xf32>
    %52 = math.tanh %51 : vector<8x32xf32>
    %53 = arith.mulf %48, %52 : vector<8x32xf32>
    %54 = vector.extract_strided_slice %13 {offsets = [16, 0], sizes = [8, 128], strides = [1, 1]} : vector<64x128xf32> to vector<8x128xf32>
    %cst_16 = arith.constant dense<0.000000e+00> : vector<8x128xf32>
    %55 = tpu.matmul %53, %17, %cst_16 {dimension_numbers = #tpu.dot_dimension_numbers<[1], [0], [0], [1], [0, 0, 1, 1], [], []>} : vector<8x32xf32>, vector<32x128xf32>, vector<8x128xf32> -> vector<8x128xf32>
    %56 = arith.addf %54, %55 : vector<8x128xf32>
    %57 = arith.negf %56 : vector<8x128xf32>
    %58 = math.exp %57 : vector<8x128xf32>
    %cst_17 = arith.constant 1.000000e+00 : f32
    %59 = vector.broadcast %cst_17 : f32 to vector<8x128xf32>
    %60 = arith.addf %59, %58 : vector<8x128xf32>
    %61 = arith.divf %59, %60 : vector<8x128xf32>
    %62 = math.tanh %56 : vector<8x128xf32>
    %63 = vector.extract_strided_slice %61 {offsets = [0, 0], sizes = [8, 32], strides = [1, 1]} : vector<8x128xf32> to vector<8x32xf32>
    %64 = vector.extract_strided_slice %61 {offsets = [0, 32], sizes = [8, 32], strides = [1, 1]} : vector<8x128xf32> to vector<8x32xf32>
    %65 = vector.extract_strided_slice %62 {offsets = [0, 64], sizes = [8, 32], strides = [1, 1]} : vector<8x128xf32> to vector<8x32xf32>
    %66 = vector.extract_strided_slice %61 {offsets = [0, 96], sizes = [8, 32], strides = [1, 1]} : vector<8x128xf32> to vector<8x32xf32>
    %67 = arith.mulf %64, %51 : vector<8x32xf32>
    %68 = arith.mulf %63, %65 : vector<8x32xf32>
    %69 = arith.addf %67, %68 : vector<8x32xf32>
    %70 = math.tanh %69 : vector<8x32xf32>
    %71 = arith.mulf %66, %70 : vector<8x32xf32>
    %72 = vector.extract_strided_slice %13 {offsets = [24, 0], sizes = [8, 128], strides = [1, 1]} : vector<64x128xf32> to vector<8x128xf32>
    %cst_18 = arith.constant dense<0.000000e+00> : vector<8x128xf32>
    %73 = tpu.matmul %71, %17, %cst_18 {dimension_numbers = #tpu.dot_dimension_numbers<[1], [0], [0], [1], [0, 0, 1, 1], [], []>} : vector<8x32xf32>, vector<32x128xf32>, vector<8x128xf32> -> vector<8x128xf32>
    %74 = arith.addf %72, %73 : vector<8x128xf32>
    %75 = arith.negf %74 : vector<8x128xf32>
    %76 = math.exp %75 : vector<8x128xf32>
    %cst_19 = arith.constant 1.000000e+00 : f32
    %77 = vector.broadcast %cst_19 : f32 to vector<8x128xf32>
    %78 = arith.addf %77, %76 : vector<8x128xf32>
    %79 = arith.divf %77, %78 : vector<8x128xf32>
    %80 = math.tanh %74 : vector<8x128xf32>
    %81 = vector.extract_strided_slice %79 {offsets = [0, 0], sizes = [8, 32], strides = [1, 1]} : vector<8x128xf32> to vector<8x32xf32>
    %82 = vector.extract_strided_slice %79 {offsets = [0, 32], sizes = [8, 32], strides = [1, 1]} : vector<8x128xf32> to vector<8x32xf32>
    %83 = vector.extract_strided_slice %80 {offsets = [0, 64], sizes = [8, 32], strides = [1, 1]} : vector<8x128xf32> to vector<8x32xf32>
    %84 = vector.extract_strided_slice %79 {offsets = [0, 96], sizes = [8, 32], strides = [1, 1]} : vector<8x128xf32> to vector<8x32xf32>
    %85 = arith.mulf %82, %69 : vector<8x32xf32>
    %86 = arith.mulf %81, %83 : vector<8x32xf32>
    %87 = arith.addf %85, %86 : vector<8x32xf32>
    %88 = math.tanh %87 : vector<8x32xf32>
    %89 = arith.mulf %84, %88 : vector<8x32xf32>
    %90 = vector.extract_strided_slice %13 {offsets = [32, 0], sizes = [8, 128], strides = [1, 1]} : vector<64x128xf32> to vector<8x128xf32>
    %cst_20 = arith.constant dense<0.000000e+00> : vector<8x128xf32>
    %91 = tpu.matmul %89, %17, %cst_20 {dimension_numbers = #tpu.dot_dimension_numbers<[1], [0], [0], [1], [0, 0, 1, 1], [], []>} : vector<8x32xf32>, vector<32x128xf32>, vector<8x128xf32> -> vector<8x128xf32>
    %92 = arith.addf %90, %91 : vector<8x128xf32>
    %93 = arith.negf %92 : vector<8x128xf32>
    %94 = math.exp %93 : vector<8x128xf32>
    %cst_21 = arith.constant 1.000000e+00 : f32
    %95 = vector.broadcast %cst_21 : f32 to vector<8x128xf32>
    %96 = arith.addf %95, %94 : vector<8x128xf32>
    %97 = arith.divf %95, %96 : vector<8x128xf32>
    %98 = math.tanh %92 : vector<8x128xf32>
    %99 = vector.extract_strided_slice %97 {offsets = [0, 0], sizes = [8, 32], strides = [1, 1]} : vector<8x128xf32> to vector<8x32xf32>
    %100 = vector.extract_strided_slice %97 {offsets = [0, 32], sizes = [8, 32], strides = [1, 1]} : vector<8x128xf32> to vector<8x32xf32>
    %101 = vector.extract_strided_slice %98 {offsets = [0, 64], sizes = [8, 32], strides = [1, 1]} : vector<8x128xf32> to vector<8x32xf32>
    %102 = vector.extract_strided_slice %97 {offsets = [0, 96], sizes = [8, 32], strides = [1, 1]} : vector<8x128xf32> to vector<8x32xf32>
    %103 = arith.mulf %100, %87 : vector<8x32xf32>
    %104 = arith.mulf %99, %101 : vector<8x32xf32>
    %105 = arith.addf %103, %104 : vector<8x32xf32>
    %106 = math.tanh %105 : vector<8x32xf32>
    %107 = arith.mulf %102, %106 : vector<8x32xf32>
    %108 = vector.extract_strided_slice %13 {offsets = [40, 0], sizes = [8, 128], strides = [1, 1]} : vector<64x128xf32> to vector<8x128xf32>
    %cst_22 = arith.constant dense<0.000000e+00> : vector<8x128xf32>
    %109 = tpu.matmul %107, %17, %cst_22 {dimension_numbers = #tpu.dot_dimension_numbers<[1], [0], [0], [1], [0, 0, 1, 1], [], []>} : vector<8x32xf32>, vector<32x128xf32>, vector<8x128xf32> -> vector<8x128xf32>
    %110 = arith.addf %108, %109 : vector<8x128xf32>
    %111 = arith.negf %110 : vector<8x128xf32>
    %112 = math.exp %111 : vector<8x128xf32>
    %cst_23 = arith.constant 1.000000e+00 : f32
    %113 = vector.broadcast %cst_23 : f32 to vector<8x128xf32>
    %114 = arith.addf %113, %112 : vector<8x128xf32>
    %115 = arith.divf %113, %114 : vector<8x128xf32>
    %116 = math.tanh %110 : vector<8x128xf32>
    %117 = vector.extract_strided_slice %115 {offsets = [0, 0], sizes = [8, 32], strides = [1, 1]} : vector<8x128xf32> to vector<8x32xf32>
    %118 = vector.extract_strided_slice %115 {offsets = [0, 32], sizes = [8, 32], strides = [1, 1]} : vector<8x128xf32> to vector<8x32xf32>
    %119 = vector.extract_strided_slice %116 {offsets = [0, 64], sizes = [8, 32], strides = [1, 1]} : vector<8x128xf32> to vector<8x32xf32>
    %120 = vector.extract_strided_slice %115 {offsets = [0, 96], sizes = [8, 32], strides = [1, 1]} : vector<8x128xf32> to vector<8x32xf32>
    %121 = arith.mulf %118, %105 : vector<8x32xf32>
    %122 = arith.mulf %117, %119 : vector<8x32xf32>
    %123 = arith.addf %121, %122 : vector<8x32xf32>
    %124 = math.tanh %123 : vector<8x32xf32>
    %125 = arith.mulf %120, %124 : vector<8x32xf32>
    %126 = vector.extract_strided_slice %13 {offsets = [48, 0], sizes = [8, 128], strides = [1, 1]} : vector<64x128xf32> to vector<8x128xf32>
    %cst_24 = arith.constant dense<0.000000e+00> : vector<8x128xf32>
    %127 = tpu.matmul %125, %17, %cst_24 {dimension_numbers = #tpu.dot_dimension_numbers<[1], [0], [0], [1], [0, 0, 1, 1], [], []>} : vector<8x32xf32>, vector<32x128xf32>, vector<8x128xf32> -> vector<8x128xf32>
    %128 = arith.addf %126, %127 : vector<8x128xf32>
    %129 = arith.negf %128 : vector<8x128xf32>
    %130 = math.exp %129 : vector<8x128xf32>
    %cst_25 = arith.constant 1.000000e+00 : f32
    %131 = vector.broadcast %cst_25 : f32 to vector<8x128xf32>
    %132 = arith.addf %131, %130 : vector<8x128xf32>
    %133 = arith.divf %131, %132 : vector<8x128xf32>
    %134 = math.tanh %128 : vector<8x128xf32>
    %135 = vector.extract_strided_slice %133 {offsets = [0, 0], sizes = [8, 32], strides = [1, 1]} : vector<8x128xf32> to vector<8x32xf32>
    %136 = vector.extract_strided_slice %133 {offsets = [0, 32], sizes = [8, 32], strides = [1, 1]} : vector<8x128xf32> to vector<8x32xf32>
    %137 = vector.extract_strided_slice %134 {offsets = [0, 64], sizes = [8, 32], strides = [1, 1]} : vector<8x128xf32> to vector<8x32xf32>
    %138 = vector.extract_strided_slice %133 {offsets = [0, 96], sizes = [8, 32], strides = [1, 1]} : vector<8x128xf32> to vector<8x32xf32>
    %139 = arith.mulf %136, %123 : vector<8x32xf32>
    %140 = arith.mulf %135, %137 : vector<8x32xf32>
    %141 = arith.addf %139, %140 : vector<8x32xf32>
    %142 = math.tanh %141 : vector<8x32xf32>
    %143 = arith.mulf %138, %142 : vector<8x32xf32>
    %144 = vector.extract_strided_slice %13 {offsets = [56, 0], sizes = [8, 128], strides = [1, 1]} : vector<64x128xf32> to vector<8x128xf32>
    %cst_26 = arith.constant dense<0.000000e+00> : vector<8x128xf32>
    %145 = tpu.matmul %143, %17, %cst_26 {dimension_numbers = #tpu.dot_dimension_numbers<[1], [0], [0], [1], [0, 0, 1, 1], [], []>} : vector<8x32xf32>, vector<32x128xf32>, vector<8x128xf32> -> vector<8x128xf32>
    %146 = arith.addf %144, %145 : vector<8x128xf32>
    %147 = arith.negf %146 : vector<8x128xf32>
    %148 = math.exp %147 : vector<8x128xf32>
    %cst_27 = arith.constant 1.000000e+00 : f32
    %149 = vector.broadcast %cst_27 : f32 to vector<8x128xf32>
    %150 = arith.addf %149, %148 : vector<8x128xf32>
    %151 = arith.divf %149, %150 : vector<8x128xf32>
    %152 = math.tanh %146 : vector<8x128xf32>
    %153 = vector.extract_strided_slice %151 {offsets = [0, 0], sizes = [8, 32], strides = [1, 1]} : vector<8x128xf32> to vector<8x32xf32>
    %154 = vector.extract_strided_slice %151 {offsets = [0, 32], sizes = [8, 32], strides = [1, 1]} : vector<8x128xf32> to vector<8x32xf32>
    %155 = vector.extract_strided_slice %152 {offsets = [0, 64], sizes = [8, 32], strides = [1, 1]} : vector<8x128xf32> to vector<8x32xf32>
    %156 = vector.extract_strided_slice %151 {offsets = [0, 96], sizes = [8, 32], strides = [1, 1]} : vector<8x128xf32> to vector<8x32xf32>
    %157 = arith.mulf %154, %141 : vector<8x32xf32>
    %158 = arith.mulf %153, %155 : vector<8x32xf32>
    %159 = arith.addf %157, %158 : vector<8x32xf32>
    %160 = math.tanh %159 : vector<8x32xf32>
    %161 = arith.mulf %156, %160 : vector<8x32xf32>
    %cst_28 = arith.constant 0.000000e+00 : f32
    %162 = vector.broadcast %cst_28 : f32 to vector<8x32xf32>
    %cst_29 = arith.constant 0.000000e+00 : f32
    %163 = vector.broadcast %cst_29 : f32 to vector<8x32xf32>
    %c0_30 = arith.constant 0 : index
    %c0_31 = arith.constant 0 : index
    %164 = vector.load %arg5[%c0_30, %c0_31] : memref<32x128xf32, #tpu.memory_space<vmem>>, vector<32x128xf32>
    %165 = vector.extract_strided_slice %14 {offsets = [56, 0], sizes = [8, 128], strides = [1, 1]} : vector<64x128xf32> to vector<8x128xf32>
    %cst_32 = arith.constant dense<0.000000e+00> : vector<8x128xf32>
    %166 = tpu.matmul %162, %164, %cst_32 {dimension_numbers = #tpu.dot_dimension_numbers<[1], [0], [0], [1], [0, 0, 1, 1], [], []>} : vector<8x32xf32>, vector<32x128xf32>, vector<8x128xf32> -> vector<8x128xf32>
    %167 = arith.addf %165, %166 : vector<8x128xf32>
    %168 = arith.negf %167 : vector<8x128xf32>
    %169 = math.exp %168 : vector<8x128xf32>
    %cst_33 = arith.constant 1.000000e+00 : f32
    %170 = vector.broadcast %cst_33 : f32 to vector<8x128xf32>
    %171 = arith.addf %170, %169 : vector<8x128xf32>
    %172 = arith.divf %170, %171 : vector<8x128xf32>
    %173 = math.tanh %167 : vector<8x128xf32>
    %174 = vector.extract_strided_slice %172 {offsets = [0, 0], sizes = [8, 32], strides = [1, 1]} : vector<8x128xf32> to vector<8x32xf32>
    %175 = vector.extract_strided_slice %172 {offsets = [0, 32], sizes = [8, 32], strides = [1, 1]} : vector<8x128xf32> to vector<8x32xf32>
    %176 = vector.extract_strided_slice %173 {offsets = [0, 64], sizes = [8, 32], strides = [1, 1]} : vector<8x128xf32> to vector<8x32xf32>
    %177 = vector.extract_strided_slice %172 {offsets = [0, 96], sizes = [8, 32], strides = [1, 1]} : vector<8x128xf32> to vector<8x32xf32>
    %178 = arith.mulf %175, %163 : vector<8x32xf32>
    %179 = arith.mulf %174, %176 : vector<8x32xf32>
    %180 = arith.addf %178, %179 : vector<8x32xf32>
    %181 = math.tanh %180 : vector<8x32xf32>
    %182 = arith.mulf %177, %181 : vector<8x32xf32>
    %183 = vector.extract_strided_slice %14 {offsets = [48, 0], sizes = [8, 128], strides = [1, 1]} : vector<64x128xf32> to vector<8x128xf32>
    %cst_34 = arith.constant dense<0.000000e+00> : vector<8x128xf32>
    %184 = tpu.matmul %182, %164, %cst_34 {dimension_numbers = #tpu.dot_dimension_numbers<[1], [0], [0], [1], [0, 0, 1, 1], [], []>} : vector<8x32xf32>, vector<32x128xf32>, vector<8x128xf32> -> vector<8x128xf32>
    %185 = arith.addf %183, %184 : vector<8x128xf32>
    %186 = arith.negf %185 : vector<8x128xf32>
    %187 = math.exp %186 : vector<8x128xf32>
    %cst_35 = arith.constant 1.000000e+00 : f32
    %188 = vector.broadcast %cst_35 : f32 to vector<8x128xf32>
    %189 = arith.addf %188, %187 : vector<8x128xf32>
    %190 = arith.divf %188, %189 : vector<8x128xf32>
    %191 = math.tanh %185 : vector<8x128xf32>
    %192 = vector.extract_strided_slice %190 {offsets = [0, 0], sizes = [8, 32], strides = [1, 1]} : vector<8x128xf32> to vector<8x32xf32>
    %193 = vector.extract_strided_slice %190 {offsets = [0, 32], sizes = [8, 32], strides = [1, 1]} : vector<8x128xf32> to vector<8x32xf32>
    %194 = vector.extract_strided_slice %191 {offsets = [0, 64], sizes = [8, 32], strides = [1, 1]} : vector<8x128xf32> to vector<8x32xf32>
    %195 = vector.extract_strided_slice %190 {offsets = [0, 96], sizes = [8, 32], strides = [1, 1]} : vector<8x128xf32> to vector<8x32xf32>
    %196 = arith.mulf %193, %180 : vector<8x32xf32>
    %197 = arith.mulf %192, %194 : vector<8x32xf32>
    %198 = arith.addf %196, %197 : vector<8x32xf32>
    %199 = math.tanh %198 : vector<8x32xf32>
    %200 = arith.mulf %195, %199 : vector<8x32xf32>
    %201 = vector.extract_strided_slice %14 {offsets = [40, 0], sizes = [8, 128], strides = [1, 1]} : vector<64x128xf32> to vector<8x128xf32>
    %cst_36 = arith.constant dense<0.000000e+00> : vector<8x128xf32>
    %202 = tpu.matmul %200, %164, %cst_36 {dimension_numbers = #tpu.dot_dimension_numbers<[1], [0], [0], [1], [0, 0, 1, 1], [], []>} : vector<8x32xf32>, vector<32x128xf32>, vector<8x128xf32> -> vector<8x128xf32>
    %203 = arith.addf %201, %202 : vector<8x128xf32>
    %204 = arith.negf %203 : vector<8x128xf32>
    %205 = math.exp %204 : vector<8x128xf32>
    %cst_37 = arith.constant 1.000000e+00 : f32
    %206 = vector.broadcast %cst_37 : f32 to vector<8x128xf32>
    %207 = arith.addf %206, %205 : vector<8x128xf32>
    %208 = arith.divf %206, %207 : vector<8x128xf32>
    %209 = math.tanh %203 : vector<8x128xf32>
    %210 = vector.extract_strided_slice %208 {offsets = [0, 0], sizes = [8, 32], strides = [1, 1]} : vector<8x128xf32> to vector<8x32xf32>
    %211 = vector.extract_strided_slice %208 {offsets = [0, 32], sizes = [8, 32], strides = [1, 1]} : vector<8x128xf32> to vector<8x32xf32>
    %212 = vector.extract_strided_slice %209 {offsets = [0, 64], sizes = [8, 32], strides = [1, 1]} : vector<8x128xf32> to vector<8x32xf32>
    %213 = vector.extract_strided_slice %208 {offsets = [0, 96], sizes = [8, 32], strides = [1, 1]} : vector<8x128xf32> to vector<8x32xf32>
    %214 = arith.mulf %211, %198 : vector<8x32xf32>
    %215 = arith.mulf %210, %212 : vector<8x32xf32>
    %216 = arith.addf %214, %215 : vector<8x32xf32>
    %217 = math.tanh %216 : vector<8x32xf32>
    %218 = arith.mulf %213, %217 : vector<8x32xf32>
    %219 = vector.extract_strided_slice %14 {offsets = [32, 0], sizes = [8, 128], strides = [1, 1]} : vector<64x128xf32> to vector<8x128xf32>
    %cst_38 = arith.constant dense<0.000000e+00> : vector<8x128xf32>
    %220 = tpu.matmul %218, %164, %cst_38 {dimension_numbers = #tpu.dot_dimension_numbers<[1], [0], [0], [1], [0, 0, 1, 1], [], []>} : vector<8x32xf32>, vector<32x128xf32>, vector<8x128xf32> -> vector<8x128xf32>
    %221 = arith.addf %219, %220 : vector<8x128xf32>
    %222 = arith.negf %221 : vector<8x128xf32>
    %223 = math.exp %222 : vector<8x128xf32>
    %cst_39 = arith.constant 1.000000e+00 : f32
    %224 = vector.broadcast %cst_39 : f32 to vector<8x128xf32>
    %225 = arith.addf %224, %223 : vector<8x128xf32>
    %226 = arith.divf %224, %225 : vector<8x128xf32>
    %227 = math.tanh %221 : vector<8x128xf32>
    %228 = vector.extract_strided_slice %226 {offsets = [0, 0], sizes = [8, 32], strides = [1, 1]} : vector<8x128xf32> to vector<8x32xf32>
    %229 = vector.extract_strided_slice %226 {offsets = [0, 32], sizes = [8, 32], strides = [1, 1]} : vector<8x128xf32> to vector<8x32xf32>
    %230 = vector.extract_strided_slice %227 {offsets = [0, 64], sizes = [8, 32], strides = [1, 1]} : vector<8x128xf32> to vector<8x32xf32>
    %231 = vector.extract_strided_slice %226 {offsets = [0, 96], sizes = [8, 32], strides = [1, 1]} : vector<8x128xf32> to vector<8x32xf32>
    %232 = arith.mulf %229, %216 : vector<8x32xf32>
    %233 = arith.mulf %228, %230 : vector<8x32xf32>
    %234 = arith.addf %232, %233 : vector<8x32xf32>
    %235 = math.tanh %234 : vector<8x32xf32>
    %236 = arith.mulf %231, %235 : vector<8x32xf32>
    %237 = vector.extract_strided_slice %14 {offsets = [24, 0], sizes = [8, 128], strides = [1, 1]} : vector<64x128xf32> to vector<8x128xf32>
    %cst_40 = arith.constant dense<0.000000e+00> : vector<8x128xf32>
    %238 = tpu.matmul %236, %164, %cst_40 {dimension_numbers = #tpu.dot_dimension_numbers<[1], [0], [0], [1], [0, 0, 1, 1], [], []>} : vector<8x32xf32>, vector<32x128xf32>, vector<8x128xf32> -> vector<8x128xf32>
    %239 = arith.addf %237, %238 : vector<8x128xf32>
    %240 = arith.negf %239 : vector<8x128xf32>
    %241 = math.exp %240 : vector<8x128xf32>
    %cst_41 = arith.constant 1.000000e+00 : f32
    %242 = vector.broadcast %cst_41 : f32 to vector<8x128xf32>
    %243 = arith.addf %242, %241 : vector<8x128xf32>
    %244 = arith.divf %242, %243 : vector<8x128xf32>
    %245 = math.tanh %239 : vector<8x128xf32>
    %246 = vector.extract_strided_slice %244 {offsets = [0, 0], sizes = [8, 32], strides = [1, 1]} : vector<8x128xf32> to vector<8x32xf32>
    %247 = vector.extract_strided_slice %244 {offsets = [0, 32], sizes = [8, 32], strides = [1, 1]} : vector<8x128xf32> to vector<8x32xf32>
    %248 = vector.extract_strided_slice %245 {offsets = [0, 64], sizes = [8, 32], strides = [1, 1]} : vector<8x128xf32> to vector<8x32xf32>
    %249 = vector.extract_strided_slice %244 {offsets = [0, 96], sizes = [8, 32], strides = [1, 1]} : vector<8x128xf32> to vector<8x32xf32>
    %250 = arith.mulf %247, %234 : vector<8x32xf32>
    %251 = arith.mulf %246, %248 : vector<8x32xf32>
    %252 = arith.addf %250, %251 : vector<8x32xf32>
    %253 = math.tanh %252 : vector<8x32xf32>
    %254 = arith.mulf %249, %253 : vector<8x32xf32>
    %255 = vector.extract_strided_slice %14 {offsets = [16, 0], sizes = [8, 128], strides = [1, 1]} : vector<64x128xf32> to vector<8x128xf32>
    %cst_42 = arith.constant dense<0.000000e+00> : vector<8x128xf32>
    %256 = tpu.matmul %254, %164, %cst_42 {dimension_numbers = #tpu.dot_dimension_numbers<[1], [0], [0], [1], [0, 0, 1, 1], [], []>} : vector<8x32xf32>, vector<32x128xf32>, vector<8x128xf32> -> vector<8x128xf32>
    %257 = arith.addf %255, %256 : vector<8x128xf32>
    %258 = arith.negf %257 : vector<8x128xf32>
    %259 = math.exp %258 : vector<8x128xf32>
    %cst_43 = arith.constant 1.000000e+00 : f32
    %260 = vector.broadcast %cst_43 : f32 to vector<8x128xf32>
    %261 = arith.addf %260, %259 : vector<8x128xf32>
    %262 = arith.divf %260, %261 : vector<8x128xf32>
    %263 = math.tanh %257 : vector<8x128xf32>
    %264 = vector.extract_strided_slice %262 {offsets = [0, 0], sizes = [8, 32], strides = [1, 1]} : vector<8x128xf32> to vector<8x32xf32>
    %265 = vector.extract_strided_slice %262 {offsets = [0, 32], sizes = [8, 32], strides = [1, 1]} : vector<8x128xf32> to vector<8x32xf32>
    %266 = vector.extract_strided_slice %263 {offsets = [0, 64], sizes = [8, 32], strides = [1, 1]} : vector<8x128xf32> to vector<8x32xf32>
    %267 = vector.extract_strided_slice %262 {offsets = [0, 96], sizes = [8, 32], strides = [1, 1]} : vector<8x128xf32> to vector<8x32xf32>
    %268 = arith.mulf %265, %252 : vector<8x32xf32>
    %269 = arith.mulf %264, %266 : vector<8x32xf32>
    %270 = arith.addf %268, %269 : vector<8x32xf32>
    %271 = math.tanh %270 : vector<8x32xf32>
    %272 = arith.mulf %267, %271 : vector<8x32xf32>
    %273 = vector.extract_strided_slice %14 {offsets = [8, 0], sizes = [8, 128], strides = [1, 1]} : vector<64x128xf32> to vector<8x128xf32>
    %cst_44 = arith.constant dense<0.000000e+00> : vector<8x128xf32>
    %274 = tpu.matmul %272, %164, %cst_44 {dimension_numbers = #tpu.dot_dimension_numbers<[1], [0], [0], [1], [0, 0, 1, 1], [], []>} : vector<8x32xf32>, vector<32x128xf32>, vector<8x128xf32> -> vector<8x128xf32>
    %275 = arith.addf %273, %274 : vector<8x128xf32>
    %276 = arith.negf %275 : vector<8x128xf32>
    %277 = math.exp %276 : vector<8x128xf32>
    %cst_45 = arith.constant 1.000000e+00 : f32
    %278 = vector.broadcast %cst_45 : f32 to vector<8x128xf32>
    %279 = arith.addf %278, %277 : vector<8x128xf32>
    %280 = arith.divf %278, %279 : vector<8x128xf32>
    %281 = math.tanh %275 : vector<8x128xf32>
    %282 = vector.extract_strided_slice %280 {offsets = [0, 0], sizes = [8, 32], strides = [1, 1]} : vector<8x128xf32> to vector<8x32xf32>
    %283 = vector.extract_strided_slice %280 {offsets = [0, 32], sizes = [8, 32], strides = [1, 1]} : vector<8x128xf32> to vector<8x32xf32>
    %284 = vector.extract_strided_slice %281 {offsets = [0, 64], sizes = [8, 32], strides = [1, 1]} : vector<8x128xf32> to vector<8x32xf32>
    %285 = vector.extract_strided_slice %280 {offsets = [0, 96], sizes = [8, 32], strides = [1, 1]} : vector<8x128xf32> to vector<8x32xf32>
    %286 = arith.mulf %283, %270 : vector<8x32xf32>
    %287 = arith.mulf %282, %284 : vector<8x32xf32>
    %288 = arith.addf %286, %287 : vector<8x32xf32>
    %289 = math.tanh %288 : vector<8x32xf32>
    %290 = arith.mulf %285, %289 : vector<8x32xf32>
    %291 = vector.extract_strided_slice %14 {offsets = [0, 0], sizes = [8, 128], strides = [1, 1]} : vector<64x128xf32> to vector<8x128xf32>
    %cst_46 = arith.constant dense<0.000000e+00> : vector<8x128xf32>
    %292 = tpu.matmul %290, %164, %cst_46 {dimension_numbers = #tpu.dot_dimension_numbers<[1], [0], [0], [1], [0, 0, 1, 1], [], []>} : vector<8x32xf32>, vector<32x128xf32>, vector<8x128xf32> -> vector<8x128xf32>
    %293 = arith.addf %291, %292 : vector<8x128xf32>
    %294 = arith.negf %293 : vector<8x128xf32>
    %295 = math.exp %294 : vector<8x128xf32>
    %cst_47 = arith.constant 1.000000e+00 : f32
    %296 = vector.broadcast %cst_47 : f32 to vector<8x128xf32>
    %297 = arith.addf %296, %295 : vector<8x128xf32>
    %298 = arith.divf %296, %297 : vector<8x128xf32>
    %299 = math.tanh %293 : vector<8x128xf32>
    %300 = vector.extract_strided_slice %298 {offsets = [0, 0], sizes = [8, 32], strides = [1, 1]} : vector<8x128xf32> to vector<8x32xf32>
    %301 = vector.extract_strided_slice %298 {offsets = [0, 32], sizes = [8, 32], strides = [1, 1]} : vector<8x128xf32> to vector<8x32xf32>
    %302 = vector.extract_strided_slice %299 {offsets = [0, 64], sizes = [8, 32], strides = [1, 1]} : vector<8x128xf32> to vector<8x32xf32>
    %303 = vector.extract_strided_slice %298 {offsets = [0, 96], sizes = [8, 32], strides = [1, 1]} : vector<8x128xf32> to vector<8x32xf32>
    %304 = arith.mulf %301, %288 : vector<8x32xf32>
    %305 = arith.mulf %300, %302 : vector<8x32xf32>
    %306 = arith.addf %304, %305 : vector<8x32xf32>
    %307 = math.tanh %306 : vector<8x32xf32>
    %308 = arith.mulf %303, %307 : vector<8x32xf32>
    %309 = tpu.concatenate %35, %53, %71, %89, %107, %125, %143, %161 in 0 : vector<8x32xf32>, vector<8x32xf32>, vector<8x32xf32>, vector<8x32xf32>, vector<8x32xf32>, vector<8x32xf32>, vector<8x32xf32>, vector<8x32xf32> -> vector<64x32xf32>
    %310 = tpu.concatenate %308, %290, %272, %254, %236, %218, %200, %182 in 0 : vector<8x32xf32>, vector<8x32xf32>, vector<8x32xf32>, vector<8x32xf32>, vector<8x32xf32>, vector<8x32xf32>, vector<8x32xf32>, vector<8x32xf32> -> vector<64x32xf32>
    %c0_48 = arith.constant 0 : index
    %c0_49 = arith.constant 0 : index
    %311 = vector.load %arg6[%c0_48, %c0_49] : memref<32x256xf32, #tpu.memory_space<vmem>>, vector<32x256xf32>
    %cst_50 = arith.constant dense<0.000000e+00> : vector<64x256xf32>
    %312 = tpu.matmul %309, %311, %cst_50 {dimension_numbers = #tpu.dot_dimension_numbers<[1], [0], [0], [1], [0, 0, 1, 1], [], []>} : vector<64x32xf32>, vector<32x256xf32>, vector<64x256xf32> -> vector<64x256xf32>
    %c0_51 = arith.constant 0 : index
    %c0_52 = arith.constant 0 : index
    %313 = vector.load %arg7[%c0_51, %c0_52] : memref<32x256xf32, #tpu.memory_space<vmem>>, vector<32x256xf32>
    %cst_53 = arith.constant dense<0.000000e+00> : vector<64x256xf32>
    %314 = tpu.matmul %310, %313, %cst_53 {dimension_numbers = #tpu.dot_dimension_numbers<[1], [0], [0], [1], [0, 0, 1, 1], [], []>} : vector<64x32xf32>, vector<32x256xf32>, vector<64x256xf32> -> vector<64x256xf32>
    %315 = arith.addf %312, %314 : vector<64x256xf32>
    %c0_54 = arith.constant 0 : index
    %c0_55 = arith.constant 0 : index
    %316 = vector.load %arg8[%c0_54, %c0_55] : memref<1x256xf32, #tpu.memory_space<vmem>>, vector<1x256xf32>
    %317 = vector.broadcast %316 : vector<1x256xf32> to vector<64x256xf32>
    %318 = arith.addf %315, %317 : vector<64x256xf32>
    %319 = vector.extract_strided_slice %318 {offsets = [0, 0], sizes = [64, 128], strides = [1, 1]} : vector<64x256xf32> to vector<64x128xf32>
    %cst_56 = arith.constant 0.000000e+00 : f32
    %320 = vector.broadcast %cst_56 : f32 to vector<8x32xf32>
    %cst_57 = arith.constant 0.000000e+00 : f32
    %321 = vector.broadcast %cst_57 : f32 to vector<8x32xf32>
    %c0_58 = arith.constant 0 : index
    %c0_59 = arith.constant 0 : index
    %322 = vector.load %arg9[%c0_58, %c0_59] : memref<32x128xf32, #tpu.memory_space<vmem>>, vector<32x128xf32>
    %323 = vector.extract_strided_slice %319 {offsets = [0, 0], sizes = [8, 128], strides = [1, 1]} : vector<64x128xf32> to vector<8x128xf32>
    %cst_60 = arith.constant dense<0.000000e+00> : vector<8x128xf32>
    %324 = tpu.matmul %320, %322, %cst_60 {dimension_numbers = #tpu.dot_dimension_numbers<[1], [0], [0], [1], [0, 0, 1, 1], [], []>} : vector<8x32xf32>, vector<32x128xf32>, vector<8x128xf32> -> vector<8x128xf32>
    %325 = arith.addf %323, %324 : vector<8x128xf32>
    %326 = arith.negf %325 : vector<8x128xf32>
    %327 = math.exp %326 : vector<8x128xf32>
    %cst_61 = arith.constant 1.000000e+00 : f32
    %328 = vector.broadcast %cst_61 : f32 to vector<8x128xf32>
    %329 = arith.addf %328, %327 : vector<8x128xf32>
    %330 = arith.divf %328, %329 : vector<8x128xf32>
    %331 = math.tanh %325 : vector<8x128xf32>
    %332 = vector.extract_strided_slice %330 {offsets = [0, 0], sizes = [8, 32], strides = [1, 1]} : vector<8x128xf32> to vector<8x32xf32>
    %333 = vector.extract_strided_slice %330 {offsets = [0, 32], sizes = [8, 32], strides = [1, 1]} : vector<8x128xf32> to vector<8x32xf32>
    %334 = vector.extract_strided_slice %331 {offsets = [0, 64], sizes = [8, 32], strides = [1, 1]} : vector<8x128xf32> to vector<8x32xf32>
    %335 = vector.extract_strided_slice %330 {offsets = [0, 96], sizes = [8, 32], strides = [1, 1]} : vector<8x128xf32> to vector<8x32xf32>
    %336 = arith.mulf %333, %321 : vector<8x32xf32>
    %337 = arith.mulf %332, %334 : vector<8x32xf32>
    %338 = arith.addf %336, %337 : vector<8x32xf32>
    %339 = math.tanh %338 : vector<8x32xf32>
    %340 = arith.mulf %335, %339 : vector<8x32xf32>
    %341 = vector.extract_strided_slice %319 {offsets = [8, 0], sizes = [8, 128], strides = [1, 1]} : vector<64x128xf32> to vector<8x128xf32>
    %cst_62 = arith.constant dense<0.000000e+00> : vector<8x128xf32>
    %342 = tpu.matmul %340, %322, %cst_62 {dimension_numbers = #tpu.dot_dimension_numbers<[1], [0], [0], [1], [0, 0, 1, 1], [], []>} : vector<8x32xf32>, vector<32x128xf32>, vector<8x128xf32> -> vector<8x128xf32>
    %343 = arith.addf %341, %342 : vector<8x128xf32>
    %344 = arith.negf %343 : vector<8x128xf32>
    %345 = math.exp %344 : vector<8x128xf32>
    %cst_63 = arith.constant 1.000000e+00 : f32
    %346 = vector.broadcast %cst_63 : f32 to vector<8x128xf32>
    %347 = arith.addf %346, %345 : vector<8x128xf32>
    %348 = arith.divf %346, %347 : vector<8x128xf32>
    %349 = math.tanh %343 : vector<8x128xf32>
    %350 = vector.extract_strided_slice %348 {offsets = [0, 0], sizes = [8, 32], strides = [1, 1]} : vector<8x128xf32> to vector<8x32xf32>
    %351 = vector.extract_strided_slice %348 {offsets = [0, 32], sizes = [8, 32], strides = [1, 1]} : vector<8x128xf32> to vector<8x32xf32>
    %352 = vector.extract_strided_slice %349 {offsets = [0, 64], sizes = [8, 32], strides = [1, 1]} : vector<8x128xf32> to vector<8x32xf32>
    %353 = vector.extract_strided_slice %348 {offsets = [0, 96], sizes = [8, 32], strides = [1, 1]} : vector<8x128xf32> to vector<8x32xf32>
    %354 = arith.mulf %351, %338 : vector<8x32xf32>
    %355 = arith.mulf %350, %352 : vector<8x32xf32>
    %356 = arith.addf %354, %355 : vector<8x32xf32>
    %357 = math.tanh %356 : vector<8x32xf32>
    %358 = arith.mulf %353, %357 : vector<8x32xf32>
    %359 = vector.extract_strided_slice %319 {offsets = [16, 0], sizes = [8, 128], strides = [1, 1]} : vector<64x128xf32> to vector<8x128xf32>
    %cst_64 = arith.constant dense<0.000000e+00> : vector<8x128xf32>
    %360 = tpu.matmul %358, %322, %cst_64 {dimension_numbers = #tpu.dot_dimension_numbers<[1], [0], [0], [1], [0, 0, 1, 1], [], []>} : vector<8x32xf32>, vector<32x128xf32>, vector<8x128xf32> -> vector<8x128xf32>
    %361 = arith.addf %359, %360 : vector<8x128xf32>
    %362 = arith.negf %361 : vector<8x128xf32>
    %363 = math.exp %362 : vector<8x128xf32>
    %cst_65 = arith.constant 1.000000e+00 : f32
    %364 = vector.broadcast %cst_65 : f32 to vector<8x128xf32>
    %365 = arith.addf %364, %363 : vector<8x128xf32>
    %366 = arith.divf %364, %365 : vector<8x128xf32>
    %367 = math.tanh %361 : vector<8x128xf32>
    %368 = vector.extract_strided_slice %366 {offsets = [0, 0], sizes = [8, 32], strides = [1, 1]} : vector<8x128xf32> to vector<8x32xf32>
    %369 = vector.extract_strided_slice %366 {offsets = [0, 32], sizes = [8, 32], strides = [1, 1]} : vector<8x128xf32> to vector<8x32xf32>
    %370 = vector.extract_strided_slice %367 {offsets = [0, 64], sizes = [8, 32], strides = [1, 1]} : vector<8x128xf32> to vector<8x32xf32>
    %371 = vector.extract_strided_slice %366 {offsets = [0, 96], sizes = [8, 32], strides = [1, 1]} : vector<8x128xf32> to vector<8x32xf32>
    %372 = arith.mulf %369, %356 : vector<8x32xf32>
    %373 = arith.mulf %368, %370 : vector<8x32xf32>
    %374 = arith.addf %372, %373 : vector<8x32xf32>
    %375 = math.tanh %374 : vector<8x32xf32>
    %376 = arith.mulf %371, %375 : vector<8x32xf32>
    %377 = vector.extract_strided_slice %319 {offsets = [24, 0], sizes = [8, 128], strides = [1, 1]} : vector<64x128xf32> to vector<8x128xf32>
    %cst_66 = arith.constant dense<0.000000e+00> : vector<8x128xf32>
    %378 = tpu.matmul %376, %322, %cst_66 {dimension_numbers = #tpu.dot_dimension_numbers<[1], [0], [0], [1], [0, 0, 1, 1], [], []>} : vector<8x32xf32>, vector<32x128xf32>, vector<8x128xf32> -> vector<8x128xf32>
    %379 = arith.addf %377, %378 : vector<8x128xf32>
    %380 = arith.negf %379 : vector<8x128xf32>
    %381 = math.exp %380 : vector<8x128xf32>
    %cst_67 = arith.constant 1.000000e+00 : f32
    %382 = vector.broadcast %cst_67 : f32 to vector<8x128xf32>
    %383 = arith.addf %382, %381 : vector<8x128xf32>
    %384 = arith.divf %382, %383 : vector<8x128xf32>
    %385 = math.tanh %379 : vector<8x128xf32>
    %386 = vector.extract_strided_slice %384 {offsets = [0, 0], sizes = [8, 32], strides = [1, 1]} : vector<8x128xf32> to vector<8x32xf32>
    %387 = vector.extract_strided_slice %384 {offsets = [0, 32], sizes = [8, 32], strides = [1, 1]} : vector<8x128xf32> to vector<8x32xf32>
    %388 = vector.extract_strided_slice %385 {offsets = [0, 64], sizes = [8, 32], strides = [1, 1]} : vector<8x128xf32> to vector<8x32xf32>
    %389 = vector.extract_strided_slice %384 {offsets = [0, 96], sizes = [8, 32], strides = [1, 1]} : vector<8x128xf32> to vector<8x32xf32>
    %390 = arith.mulf %387, %374 : vector<8x32xf32>
    %391 = arith.mulf %386, %388 : vector<8x32xf32>
    %392 = arith.addf %390, %391 : vector<8x32xf32>
    %393 = math.tanh %392 : vector<8x32xf32>
    %394 = arith.mulf %389, %393 : vector<8x32xf32>
    %395 = vector.extract_strided_slice %319 {offsets = [32, 0], sizes = [8, 128], strides = [1, 1]} : vector<64x128xf32> to vector<8x128xf32>
    %cst_68 = arith.constant dense<0.000000e+00> : vector<8x128xf32>
    %396 = tpu.matmul %394, %322, %cst_68 {dimension_numbers = #tpu.dot_dimension_numbers<[1], [0], [0], [1], [0, 0, 1, 1], [], []>} : vector<8x32xf32>, vector<32x128xf32>, vector<8x128xf32> -> vector<8x128xf32>
    %397 = arith.addf %395, %396 : vector<8x128xf32>
    %398 = arith.negf %397 : vector<8x128xf32>
    %399 = math.exp %398 : vector<8x128xf32>
    %cst_69 = arith.constant 1.000000e+00 : f32
    %400 = vector.broadcast %cst_69 : f32 to vector<8x128xf32>
    %401 = arith.addf %400, %399 : vector<8x128xf32>
    %402 = arith.divf %400, %401 : vector<8x128xf32>
    %403 = math.tanh %397 : vector<8x128xf32>
    %404 = vector.extract_strided_slice %402 {offsets = [0, 0], sizes = [8, 32], strides = [1, 1]} : vector<8x128xf32> to vector<8x32xf32>
    %405 = vector.extract_strided_slice %402 {offsets = [0, 32], sizes = [8, 32], strides = [1, 1]} : vector<8x128xf32> to vector<8x32xf32>
    %406 = vector.extract_strided_slice %403 {offsets = [0, 64], sizes = [8, 32], strides = [1, 1]} : vector<8x128xf32> to vector<8x32xf32>
    %407 = vector.extract_strided_slice %402 {offsets = [0, 96], sizes = [8, 32], strides = [1, 1]} : vector<8x128xf32> to vector<8x32xf32>
    %408 = arith.mulf %405, %392 : vector<8x32xf32>
    %409 = arith.mulf %404, %406 : vector<8x32xf32>
    %410 = arith.addf %408, %409 : vector<8x32xf32>
    %411 = math.tanh %410 : vector<8x32xf32>
    %412 = arith.mulf %407, %411 : vector<8x32xf32>
    %413 = vector.extract_strided_slice %319 {offsets = [40, 0], sizes = [8, 128], strides = [1, 1]} : vector<64x128xf32> to vector<8x128xf32>
    %cst_70 = arith.constant dense<0.000000e+00> : vector<8x128xf32>
    %414 = tpu.matmul %412, %322, %cst_70 {dimension_numbers = #tpu.dot_dimension_numbers<[1], [0], [0], [1], [0, 0, 1, 1], [], []>} : vector<8x32xf32>, vector<32x128xf32>, vector<8x128xf32> -> vector<8x128xf32>
    %415 = arith.addf %413, %414 : vector<8x128xf32>
    %416 = arith.negf %415 : vector<8x128xf32>
    %417 = math.exp %416 : vector<8x128xf32>
    %cst_71 = arith.constant 1.000000e+00 : f32
    %418 = vector.broadcast %cst_71 : f32 to vector<8x128xf32>
    %419 = arith.addf %418, %417 : vector<8x128xf32>
    %420 = arith.divf %418, %419 : vector<8x128xf32>
    %421 = math.tanh %415 : vector<8x128xf32>
    %422 = vector.extract_strided_slice %420 {offsets = [0, 0], sizes = [8, 32], strides = [1, 1]} : vector<8x128xf32> to vector<8x32xf32>
    %423 = vector.extract_strided_slice %420 {offsets = [0, 32], sizes = [8, 32], strides = [1, 1]} : vector<8x128xf32> to vector<8x32xf32>
    %424 = vector.extract_strided_slice %421 {offsets = [0, 64], sizes = [8, 32], strides = [1, 1]} : vector<8x128xf32> to vector<8x32xf32>
    %425 = vector.extract_strided_slice %420 {offsets = [0, 96], sizes = [8, 32], strides = [1, 1]} : vector<8x128xf32> to vector<8x32xf32>
    %426 = arith.mulf %423, %410 : vector<8x32xf32>
    %427 = arith.mulf %422, %424 : vector<8x32xf32>
    %428 = arith.addf %426, %427 : vector<8x32xf32>
    %429 = math.tanh %428 : vector<8x32xf32>
    %430 = arith.mulf %425, %429 : vector<8x32xf32>
    %431 = vector.extract_strided_slice %319 {offsets = [48, 0], sizes = [8, 128], strides = [1, 1]} : vector<64x128xf32> to vector<8x128xf32>
    %cst_72 = arith.constant dense<0.000000e+00> : vector<8x128xf32>
    %432 = tpu.matmul %430, %322, %cst_72 {dimension_numbers = #tpu.dot_dimension_numbers<[1], [0], [0], [1], [0, 0, 1, 1], [], []>} : vector<8x32xf32>, vector<32x128xf32>, vector<8x128xf32> -> vector<8x128xf32>
    %433 = arith.addf %431, %432 : vector<8x128xf32>
    %434 = arith.negf %433 : vector<8x128xf32>
    %435 = math.exp %434 : vector<8x128xf32>
    %cst_73 = arith.constant 1.000000e+00 : f32
    %436 = vector.broadcast %cst_73 : f32 to vector<8x128xf32>
    %437 = arith.addf %436, %435 : vector<8x128xf32>
    %438 = arith.divf %436, %437 : vector<8x128xf32>
    %439 = math.tanh %433 : vector<8x128xf32>
    %440 = vector.extract_strided_slice %438 {offsets = [0, 0], sizes = [8, 32], strides = [1, 1]} : vector<8x128xf32> to vector<8x32xf32>
    %441 = vector.extract_strided_slice %438 {offsets = [0, 32], sizes = [8, 32], strides = [1, 1]} : vector<8x128xf32> to vector<8x32xf32>
    %442 = vector.extract_strided_slice %439 {offsets = [0, 64], sizes = [8, 32], strides = [1, 1]} : vector<8x128xf32> to vector<8x32xf32>
    %443 = vector.extract_strided_slice %438 {offsets = [0, 96], sizes = [8, 32], strides = [1, 1]} : vector<8x128xf32> to vector<8x32xf32>
    %444 = arith.mulf %441, %428 : vector<8x32xf32>
    %445 = arith.mulf %440, %442 : vector<8x32xf32>
    %446 = arith.addf %444, %445 : vector<8x32xf32>
    %447 = math.tanh %446 : vector<8x32xf32>
    %448 = arith.mulf %443, %447 : vector<8x32xf32>
    %449 = vector.extract_strided_slice %319 {offsets = [56, 0], sizes = [8, 128], strides = [1, 1]} : vector<64x128xf32> to vector<8x128xf32>
    %cst_74 = arith.constant dense<0.000000e+00> : vector<8x128xf32>
    %450 = tpu.matmul %448, %322, %cst_74 {dimension_numbers = #tpu.dot_dimension_numbers<[1], [0], [0], [1], [0, 0, 1, 1], [], []>} : vector<8x32xf32>, vector<32x128xf32>, vector<8x128xf32> -> vector<8x128xf32>
    %451 = arith.addf %449, %450 : vector<8x128xf32>
    %452 = arith.negf %451 : vector<8x128xf32>
    %453 = math.exp %452 : vector<8x128xf32>
    %cst_75 = arith.constant 1.000000e+00 : f32
    %454 = vector.broadcast %cst_75 : f32 to vector<8x128xf32>
    %455 = arith.addf %454, %453 : vector<8x128xf32>
    %456 = arith.divf %454, %455 : vector<8x128xf32>
    %457 = math.tanh %451 : vector<8x128xf32>
    %458 = vector.extract_strided_slice %456 {offsets = [0, 0], sizes = [8, 32], strides = [1, 1]} : vector<8x128xf32> to vector<8x32xf32>
    %459 = vector.extract_strided_slice %456 {offsets = [0, 32], sizes = [8, 32], strides = [1, 1]} : vector<8x128xf32> to vector<8x32xf32>
    %460 = vector.extract_strided_slice %457 {offsets = [0, 64], sizes = [8, 32], strides = [1, 1]} : vector<8x128xf32> to vector<8x32xf32>
    %461 = vector.extract_strided_slice %456 {offsets = [0, 96], sizes = [8, 32], strides = [1, 1]} : vector<8x128xf32> to vector<8x32xf32>
    %462 = arith.mulf %459, %446 : vector<8x32xf32>
    %463 = arith.mulf %458, %460 : vector<8x32xf32>
    %464 = arith.addf %462, %463 : vector<8x32xf32>
    %465 = math.tanh %464 : vector<8x32xf32>
    %466 = arith.mulf %461, %465 : vector<8x32xf32>
    %467 = vector.extract_strided_slice %318 {offsets = [56, 128], sizes = [8, 128], strides = [1, 1]} : vector<64x256xf32> to vector<8x128xf32>
    %468 = arith.negf %467 : vector<8x128xf32>
    %469 = math.exp %468 : vector<8x128xf32>
    %cst_76 = arith.constant 1.000000e+00 : f32
    %470 = vector.broadcast %cst_76 : f32 to vector<8x128xf32>
    %471 = arith.addf %470, %469 : vector<8x128xf32>
    %472 = arith.divf %470, %471 : vector<8x128xf32>
    %473 = math.tanh %467 : vector<8x128xf32>
    %474 = vector.extract_strided_slice %472 {offsets = [0, 0], sizes = [8, 32], strides = [1, 1]} : vector<8x128xf32> to vector<8x32xf32>
    %475 = vector.extract_strided_slice %473 {offsets = [0, 64], sizes = [8, 32], strides = [1, 1]} : vector<8x128xf32> to vector<8x32xf32>
    %476 = vector.extract_strided_slice %472 {offsets = [0, 96], sizes = [8, 32], strides = [1, 1]} : vector<8x128xf32> to vector<8x32xf32>
    %477 = arith.mulf %474, %475 : vector<8x32xf32>
    %478 = math.tanh %477 : vector<8x32xf32>
    %479 = arith.mulf %476, %478 : vector<8x32xf32>
    %c0_77 = arith.constant 0 : index
    %c0_78 = arith.constant 0 : index
    %480 = vector.load %arg10[%c0_77, %c0_78] : memref<64x64xf32, #tpu.memory_space<vmem>>, vector<32x64xf32>
    %cst_79 = arith.constant dense<0.000000e+00> : vector<8x64xf32>
    %481 = tpu.matmul %466, %480, %cst_79 {dimension_numbers = #tpu.dot_dimension_numbers<[1], [0], [0], [1], [0, 0, 1, 1], [], []>} : vector<8x32xf32>, vector<32x64xf32>, vector<8x64xf32> -> vector<8x64xf32>
    %c32 = arith.constant 32 : index
    %c0_80 = arith.constant 0 : index
    %482 = vector.load %arg10[%c32, %c0_80] : memref<64x64xf32, #tpu.memory_space<vmem>>, vector<32x64xf32>
    %cst_81 = arith.constant dense<0.000000e+00> : vector<8x64xf32>
    %483 = tpu.matmul %479, %482, %cst_81 {dimension_numbers = #tpu.dot_dimension_numbers<[1], [0], [0], [1], [0, 0, 1, 1], [], []>} : vector<8x32xf32>, vector<32x64xf32>, vector<8x64xf32> -> vector<8x64xf32>
    %484 = arith.addf %481, %483 : vector<8x64xf32>
    %c0_82 = arith.constant 0 : index
    %c0_83 = arith.constant 0 : index
    %485 = vector.load %arg11[%c0_82, %c0_83] : memref<1x64xf32, #tpu.memory_space<vmem>>, vector<1x64xf32>
    %486 = vector.broadcast %485 : vector<1x64xf32> to vector<8x64xf32>
    %487 = arith.addf %484, %486 : vector<8x64xf32>
    %cst_84 = arith.constant 0.000000e+00 : f32
    %488 = vector.broadcast %cst_84 : f32 to vector<8x64xf32>
    %489 = arith.maximumf %487, %488 : vector<8x64xf32>
    %c0_85 = arith.constant 0 : index
    %c0_86 = arith.constant 0 : index
    %490 = vector.load %arg12[%c0_85, %c0_86] : memref<64x64xf32, #tpu.memory_space<vmem>>, vector<64x64xf32>
    %cst_87 = arith.constant dense<0.000000e+00> : vector<8x64xf32>
    %491 = tpu.matmul %489, %490, %cst_87 {dimension_numbers = #tpu.dot_dimension_numbers<[1], [0], [0], [1], [0, 0, 1, 1], [], []>} : vector<8x64xf32>, vector<64x64xf32>, vector<8x64xf32> -> vector<8x64xf32>
    %c0_88 = arith.constant 0 : index
    %c0_89 = arith.constant 0 : index
    %492 = vector.load %arg13[%c0_88, %c0_89] : memref<1x64xf32, #tpu.memory_space<vmem>>, vector<1x64xf32>
    %493 = vector.broadcast %492 : vector<1x64xf32> to vector<8x64xf32>
    %494 = arith.addf %491, %493 : vector<8x64xf32>
    %495 = vector.extract_strided_slice %494 {offsets = [0, 0], sizes = [2, 64], strides = [1, 1]} : vector<8x64xf32> to vector<2x64xf32>
    %c0_90 = arith.constant 0 : index
    %c0_91 = arith.constant 0 : index
    %496 = vector.load %arg14[%c0_90, %c0_91] : memref<2x64xf32, #tpu.memory_space<vmem>>, vector<2x64xf32>
    tpu.vector_store %arg14[%c0_90, %c0_91], %495 {strides = array<i32>} : memref<2x64xf32, #tpu.memory_space<vmem>>, vector<2x64xf32>,
    return
  }
}

</mosaic_0001>

<llo_original>
// kernel: leonard_bilstm_forward.1
$region0: #{leonard_bilstm_forward.1}
  #allocation0 [shape = 'u32[]', space=smem, size = 0x4, offset = 0x4, fixed_abs, tag = 'smem constant byte address 0x4 - core index']
  #allocation1 [shape = 'u32[72,128]{1,0:T(1,128)}', space=vmem, size = 0x9000, scoped, tag = 'internal scratch']
  %s0 = inlined_call_operand.vmem [shape: s32[64,1], index: 0, kind: input, shape index: {}]
  %s1 = inlined_call_operand.vmem [shape: f32[64,32], index: 1, kind: input, shape index: {}]
  %s2 = inlined_call_operand.vmem [shape: f32[32,256], index: 2, kind: input, shape index: {}]
  %s3 = inlined_call_operand.vmem [shape: f32[1,256], index: 3, kind: input, shape index: {}]
  %s4 = inlined_call_operand.vmem [shape: f32[32,128], index: 4, kind: input, shape index: {}]
  %s5 = inlined_call_operand.hbm [shape: f32[32,128], index: 5, kind: input, shape index: {}]
  %s6 = inlined_call_operand.vmem [shape: f32[32,256], index: 6, kind: input, shape index: {}]
  %s7 = inlined_call_operand.hbm [shape: f32[32,256], index: 7, kind: input, shape index: {}]
  %s8 = inlined_call_operand.vmem [shape: f32[1,256], index: 8, kind: input, shape index: {}]
  %s9 = inlined_call_operand.hbm [shape: f32[32,128], index: 9, kind: input, shape index: {}]
  %s10 = inlined_call_operand.hbm [shape: f32[64,64], index: 10, kind: input, shape index: {}]
  %s11 = inlined_call_operand.vmem [shape: f32[1,64], index: 11, kind: input, shape index: {}]
  %s12 = inlined_call_operand.hbm [shape: f32[64,64], index: 12, kind: input, shape index: {}]
  %s13 = inlined_call_operand.vmem [shape: f32[1,64], index: 13, kind: input, shape index: {}]
  %s14 = inlined_call_operand.hbm [shape: f32[2,64], index: 14, kind: output, shape index: {}]
  %s15 = sld [smem:[#allocation0]]
  $region86: #{leonard_bilstm_forward.1} parent=0
    _
  %s17 = ssub.s32 1, %s15
  %s18 = scalar_select 0, %s17, %s15
  $region1: #{leonard_bilstm_forward.1} parent=0
    #allocation2 [shape = 'u8[16384]{0}', space=vmem, size = 0x4000, scoped, tag = 'input window, operand 5, single buffered']
    #allocation3 [shape = 's32[1]{0}', space=sflag, size = 0x4, scoped, tag = 'scoped memory for leonard_bilstm_forward.1']
    #allocation4 [shape = 's32[1]{0}', space=sflag, size = 0x4, scoped, tag = 'scoped memory for leonard_bilstm_forward.1']
    #allocation5 [shape = 'u8[32768]{0}', space=vmem, size = 0x8000, scoped, tag = 'input window, operand 7, single buffered']
    #allocation6 [shape = 's32[1]{0}', space=sflag, size = 0x4, scoped, tag = 'scoped memory for leonard_bilstm_forward.1']
    #allocation7 [shape = 'u8[16384]{0}', space=vmem, size = 0x4000, scoped, tag = 'input window, operand 9, single buffered']
    #allocation8 [shape = 'u8[32768]{0}', space=vmem, size = 0x8000, scoped, tag = 'input window, operand 10, single buffered']
    #allocation9 [shape = 's32[1]{0}', space=sflag, size = 0x4, scoped, tag = 'scoped memory for leonard_bilstm_forward.1']
    #allocation10 [shape = 'u8[32768]{0}', space=vmem, size = 0x8000, scoped, tag = 'input window, operand 12, single buffered']
    #allocation11 [shape = 'u8[1024]{0}', space=vmem, size = 0x400, scoped, tag = 'output window, operand 0, single buffered']
    %19 = vsyncpa [#allocation3], 0
    %20 = vsyncpa [#allocation6], 0
    %21 = vsyncpa [#allocation9], 0
    %22 = vsyncpa [#allocation4], 0
    // Predicated region
    $region2: #{leonard_bilstm_forward.1} parent=1 // pred_check
      _
    $region3: #{leonard_bilstm_forward.1} parent=1 // pred_check_branch
      %24 = sbr.rel (0) target = $region5
    $region4: #{leonard_bilstm_forward.1} parent=1 // pred_region
      _
    $region5: #{leonard_bilstm_forward.1} parent=1 // pred_fallthru
      _
    // Predicated region
    $region6: #{leonard_bilstm_forward.1} parent=1 // pred_check
      _
    $region7: #{leonard_bilstm_forward.1} parent=1 // pred_check_branch
      %26 = sbr.rel (0) target = $region9
    $region8: #{leonard_bilstm_forward.1} parent=1 // pred_region
      _
    $region9: #{leonard_bilstm_forward.1} parent=1 // pred_fallthru
      _
    // Predicated region
    $region10: #{leonard_bilstm_forward.1} parent=1 // pred_check
      _
    $region11: #{leonard_bilstm_forward.1} parent=1 // pred_check_branch
      %28 = sbr.rel (0) target = $region13
    $region12: #{leonard_bilstm_forward.1} parent=1 // pred_region
      _
    $region13: #{leonard_bilstm_forward.1} parent=1 // pred_fallthru
      _
    // Predicated region
    $region14: #{leonard_bilstm_forward.1} parent=1 // pred_check
      _
    $region15: #{leonard_bilstm_forward.1} parent=1 // pred_check_branch
      %30 = sbr.rel (0) target = $region17
    $region16: #{leonard_bilstm_forward.1} parent=1 // pred_region
      _
    $region17: #{leonard_bilstm_forward.1} parent=1 // pred_fallthru
      _
    // Predicated region
    $region18: #{leonard_bilstm_forward.1} parent=1 // pred_check
      _
    $region19: #{leonard_bilstm_forward.1} parent=1 // pred_check_branch
      %32 = sbr.rel (0) target = $region21
    $region20: #{leonard_bilstm_forward.1} parent=1 // pred_region
      _
    $region21: #{leonard_bilstm_forward.1} parent=1 // pred_fallthru
      _
    // Predicated region
    $region22: #{leonard_bilstm_forward.1} parent=1 // pred_check
      _
    $region23: #{leonard_bilstm_forward.1} parent=1 // pred_check_branch
      %34 = sbr.rel (0) target = $region25
    $region24: #{leonard_bilstm_forward.1} parent=1 // pred_region
      %36 = vsyncadd [#allocation3], 0
      %s37 = sshll.u32 %s5, 4
      %s38 = int_to_ptr.hbm [resolvable:$true] %s37
      %s39 = sshll.u32 [#allocation2], 4
      %s40 = int_to_ptr.vmem [resolvable:$true] %s39
      %45 = dma.hbm_to_vmem [thread:$0]  %s38, 512, %s40, [#allocation3], 128, 128, 8
    $region25: #{leonard_bilstm_forward.1} parent=1 // pred_fallthru
      _
    // Predicated region
    $region26: #{leonard_bilstm_forward.1} parent=1 // pred_check
      _
    $region27: #{leonard_bilstm_forward.1} parent=1 // pred_check_branch
      %47 = sbr.rel (0) target = $region29
    $region28: #{leonard_bilstm_forward.1} parent=1 // pred_region
      _
    $region29: #{leonard_bilstm_forward.1} parent=1 // pred_fallthru
      _
    // Predicated region
    $region30: #{leonard_bilstm_forward.1} parent=1 // pred_check
      _
    $region31: #{leonard_bilstm_forward.1} parent=1 // pred_check_branch
      %49 = sbr.rel (0) target = $region33
    $region32: #{leonard_bilstm_forward.1} parent=1 // pred_region
      %51 = vsyncadd [#allocation6], 0
      %s52 = sshll.u32 %s7, 4
      %s53 = int_to_ptr.hbm [resolvable:$true] %s52
      %s54 = sshll.u32 [#allocation5], 4
      %s55 = int_to_ptr.vmem [resolvable:$true] %s54
      %60 = dma.hbm_to_vmem [thread:$0]  %s53, 1024, %s55, [#allocation6], 256, 256, 16
    $region33: #{leonard_bilstm_forward.1} parent=1 // pred_fallthru
      _
    // Predicated region
    $region34: #{leonard_bilstm_forward.1} parent=1 // pred_check
      _
    $region35: #{leonard_bilstm_forward.1} parent=1 // pred_check_branch
      %62 = sbr.rel (0) target = $region37
    $region36: #{leonard_bilstm_forward.1} parent=1 // pred_region
      _
    $region37: #{leonard_bilstm_forward.1} parent=1 // pred_fallthru
      _
    // Predicated region
    $region38: #{leonard_bilstm_forward.1} parent=1 // pred_check
      _
    $region39: #{leonard_bilstm_forward.1} parent=1 // pred_check_branch
      %64 = sbr.rel (0) target = $region41
    $region40: #{leonard_bilstm_forward.1} parent=1 // pred_region
      %66 = vsyncadd [#allocation6], 0
      %s67 = sshll.u32 %s9, 4
      %s68 = int_to_ptr.hbm [resolvable:$true] %s67
      %s69 = sshll.u32 [#allocation7], 4
      %s70 = int_to_ptr.vmem [resolvable:$true] %s69
      %75 = dma.hbm_to_vmem [thread:$0]  %s68, 512, %s70, [#allocation6], 128, 128, 8
    $region41: #{leonard_bilstm_forward.1} parent=1 // pred_fallthru
      _
    // Predicated region
    $region42: #{leonard_bilstm_forward.1} parent=1 // pred_check
      _
    $region43: #{leonard_bilstm_forward.1} parent=1 // pred_check_branch
      %77 = sbr.rel (0) target = $region45
    $region44: #{leonard_bilstm_forward.1} parent=1 // pred_region
      %79 = vsyncadd [#allocation9], 0
      %s80 = sshll.u32 %s10, 4
      %s81 = int_to_ptr.hbm [resolvable:$true] %s80
      %s82 = sshll.u32 [#allocation8], 4
      %s83 = int_to_ptr.vmem [resolvable:$true] %s82
      %88 = dma.hbm_to_vmem [thread:$0]  %s81, 1024, %s83, [#allocation9], 128, 128, 8
    $region45: #{leonard_bilstm_forward.1} parent=1 // pred_fallthru
      _
    // Predicated region
    $region46: #{leonard_bilstm_forward.1} parent=1 // pred_check
      _
    $region47: #{leonard_bilstm_forward.1} parent=1 // pred_check_branch
      %90 = sbr.rel (0) target = $region49
    $region48: #{leonard_bilstm_forward.1} parent=1 // pred_region
      _
    $region49: #{leonard_bilstm_forward.1} parent=1 // pred_fallthru
      _
    // Predicated region
    $region50: #{leonard_bilstm_forward.1} parent=1 // pred_check
      _
    $region51: #{leonard_bilstm_forward.1} parent=1 // pred_check_branch
      %92 = sbr.rel (0) target = $region53
    $region52: #{leonard_bilstm_forward.1} parent=1 // pred_region
      %94 = vsyncadd [#allocation9], 0
      %s95 = sshll.u32 %s12, 4
      %s96 = int_to_ptr.hbm [resolvable:$true] %s95
      %s97 = sshll.u32 [#allocation10], 4
      %s98 = int_to_ptr.vmem [resolvable:$true] %s97
      %103 = dma.hbm_to_vmem [thread:$0]  %s96, 1024, %s98, [#allocation9], 128, 128, 8
    $region53: #{leonard_bilstm_forward.1} parent=1 // pred_fallthru
      _
    // Predicated region
    $region54: #{leonard_bilstm_forward.1} parent=1 // pred_check
      _
    $region55: #{leonard_bilstm_forward.1} parent=1 // pred_check_branch
      %105 = sbr.rel (0) target = $region57
    $region56: #{leonard_bilstm_forward.1} parent=1 // pred_region
      _
    $region57: #{leonard_bilstm_forward.1} parent=1 // pred_fallthru
      _
    // Predicated region
    $region58: #{leonard_bilstm_forward.1} parent=1 // pred_check
      _
    $region59: #{leonard_bilstm_forward.1} parent=1 // pred_check_branch
      %107 = sbr.rel (0) target = $region61
    $region60: #{leonard_bilstm_forward.1} parent=1 // pred_region
      %109 = dma.done [#allocation3], 512
    $region61: #{leonard_bilstm_forward.1} parent=1 // pred_fallthru
      _
    // Predicated region
    $region62: #{leonard_bilstm_forward.1} parent=1 // pred_check
      _
    $region63: #{leonard_bilstm_forward.1} parent=1 // pred_check_branch
      %111 = sbr.rel (0) target = $region65
    $region64: #{leonard_bilstm_forward.1} parent=1 // pred_region
      %113 = dma.done [#allocation6], 1024
    $region65: #{leonard_bilstm_forward.1} parent=1 // pred_fallthru
      _
    // Predicated region
    $region66: #{leonard_bilstm_forward.1} parent=1 // pred_check
      _
    $region67: #{leonard_bilstm_forward.1} parent=1 // pred_check_branch
      %115 = sbr.rel (0) target = $region69
    $region68: #{leonard_bilstm_forward.1} parent=1 // pred_region
      %117 = dma.done [#allocation6], 512
    $region69: #{leonard_bilstm_forward.1} parent=1 // pred_fallthru
      _
    // Predicated region
    $region70: #{leonard_bilstm_forward.1} parent=1 // pred_check
      _
    $region71: #{leonard_bilstm_forward.1} parent=1 // pred_check_branch
      %119 = sbr.rel (0) target = $region73
    $region72: #{leonard_bilstm_forward.1} parent=1 // pred_region
      %121 = dma.done [#allocation9], 1024
    $region73: #{leonard_bilstm_forward.1} parent=1 // pred_fallthru
      _
    // Predicated region
    $region74: #{leonard_bilstm_forward.1} parent=1 // pred_check
      _
    $region75: #{leonard_bilstm_forward.1} parent=1 // pred_check_branch
      %123 = sbr.rel (0) target = $region77
    $region76: #{leonard_bilstm_forward.1} parent=1 // pred_region
      %125 = dma.done [#allocation9], 1024
    $region77: #{leonard_bilstm_forward.1} parent=1 // pred_fallthru
      _
    %v126 = vld [vmem:[%s0] sm:$0xff]
    %v127 = vld [vmem:[%s0 + $0x8] sm:$0xff]
    %v128 = vld [vmem:[%s0 + $0x10] sm:$0xff]
    %v129 = vld [vmem:[%s0 + $0x18] sm:$0xff]
    %v130 = vld [vmem:[%s0 + $0x20] sm:$0xff]
    %v131 = vld [vmem:[%s0 + $0x28] sm:$0xff]
    %v132 = vld [vmem:[%s0 + $0x30] sm:$0xff]
    %v133 = vld [vmem:[%s0 + $0x38] sm:$0xff]
    %v134 = vlaneseq
    %v135 = vand.u32 %v134, 127
    %136 = vset.pattern.permute.xlu0 0
    %137 = vperm.xlu0 %136, %v126
    %v138 = vpop.permute.xlu0 %137
    %139 = vset.pattern.permute.xlu0 0
    %140 = vperm.xlu0 %139, %v127
    %v141 = vpop.permute.xlu0 %140
    %142 = vset.pattern.permute.xlu0 0
    %143 = vperm.xlu0 %142, %v128
    %v144 = vpop.permute.xlu0 %143
    %145 = vset.pattern.permute.xlu0 0
    %146 = vperm.xlu0 %145, %v129
    %v147 = vpop.permute.xlu0 %146
    %148 = vset.pattern.permute.xlu0 0
    %149 = vperm.xlu0 %148, %v130
    %v150 = vpop.permute.xlu0 %149
    %151 = vset.pattern.permute.xlu0 0
    %152 = vperm.xlu0 %151, %v131
    %v153 = vpop.permute.xlu0 %152
    %154 = vset.pattern.permute.xlu0 0
    %155 = vperm.xlu0 %154, %v132
    %v156 = vpop.permute.xlu0 %155
    %157 = vset.pattern.permute.xlu0 0
    %158 = vperm.xlu0 %157, %v133
    %v159 = vpop.permute.xlu0 %158
    %vm160 = vcmp.eq.s32.totalorder %v135, %v138
    %vm161 = vcmp.eq.s32.totalorder %v135, %v141
    %vm162 = vcmp.eq.s32.totalorder %v135, %v144
    %vm163 = vcmp.eq.s32.totalorder %v135, %v147
    %vm164 = vcmp.eq.s32.totalorder %v135, %v150
    %vm165 = vcmp.eq.s32.totalorder %v135, %v153
    %vm166 = vcmp.eq.s32.totalorder %v135, %v156
    %vm167 = vcmp.eq.s32.totalorder %v135, %v159
    %v168 = vsel %vm160, 1, 0
    %v169 = vsel %vm161, 1, 0
    %v170 = vsel %vm162, 1, 0
    %v171 = vsel %vm163, 1, 0
    %v172 = vsel %vm164, 1, 0
    %v173 = vsel %vm165, 1, 0
    %v174 = vsel %vm166, 1, 0
    %v175 = vsel %vm167, 1, 0
    %v176 = vcvt.s32.f32 %v168
    %v177 = vcvt.s32.f32 %v169
    %v178 = vcvt.s32.f32 %v170
    %v179 = vcvt.s32.f32 %v171
    %v180 = vcvt.s32.f32 %v172
    %v181 = vcvt.s32.f32 %v173
    %v182 = vcvt.s32.f32 %v174
    %v183 = vcvt.s32.f32 %v175
    %v184 = vld [vmem:[%s1] sm:$0xff]
    %v185 = vld [vmem:[%s1 + $0x8] sm:$0xff]
    %v186 = vld [vmem:[%s1 + $0x10] sm:$0xff]
    %v187 = vld [vmem:[%s1 + $0x18] sm:$0xff]
    %v188 = vld [vmem:[%s1 + $0x20] sm:$0xff]
    %v189 = vld [vmem:[%s1 + $0x28] sm:$0xff]
    %v190 = vld [vmem:[%s1 + $0x30] sm:$0xff]
    %v191 = vld [vmem:[%s1 + $0x38] sm:$0xff]
    %vm192 = vcmask 523264
    %v194 = vsel %vm192, %v176, 0
    %v197 = vsel %vm192, %v177, 0
    %v200 = vsel %vm192, %v178, 0
    %v203 = vsel %vm192, %v179, 0
    %v206 = vsel %vm192, %v180, 0
    %v209 = vsel %vm192, %v181, 0
    %v212 = vsel %vm192, %v182, 0
    %v215 = vsel %vm192, %v183, 0
    %217 = vmatpush.msra.mxu0 0.0
    %218 = vmatpush.msra.mxu0 0.0
    %219 = vmatpush.msra.mxu0 0.0
    %220 = vmatpush.msra.mxu0 0.0
    %221 = vmatpush.msra.mxu0 0.0
    %222 = vmatpush.msra.mxu0 0.0
    %223 = vmatpush.msra.mxu0 0.0
    %224 = vmatpush.msra.mxu0 0.0
    %225 = vmatpush.msra.mxu0 %v191
    %226 = vmatpush.msra.mxu0 %v190
    %227 = vmatpush.msra.mxu0 %v189
    %228 = vmatpush.msra.mxu0 %v188
    %229 = vmatpush.msra.mxu0 %v187
    %230 = vmatpush.msra.mxu0 %v186
    %231 = vmatpush.msra.mxu0 %v185
    %232 = vmatpush.msra.mxu0 %v184
    %233 = vmatmul.f32.gmra.mxu0 %v194
    %v234 = vpop.f32.mrf.mxu0
    %v235 = vadd.f32 0.0, %v234
    %236 = vmatmul.f32.gmra.mxu0 %v197
    %v237 = vpop.f32.mrf.mxu0
    %v238 = vadd.f32 0.0, %v237
    %239 = vmatmul.f32.gmra.mxu0 %v200
    %v240 = vpop.f32.mrf.mxu0
    %v241 = vadd.f32 0.0, %v240
    %242 = vmatmul.f32.gmra.mxu0 %v203
    %v243 = vpop.f32.mrf.mxu0
    %v244 = vadd.f32 0.0, %v243
    %245 = vmatmul.f32.gmra.mxu0 %v206
    %v246 = vpop.f32.mrf.mxu0
    %v247 = vadd.f32 0.0, %v246
    %248 = vmatmul.f32.gmra.mxu0 %v209
    %v249 = vpop.f32.mrf.mxu0
    %v250 = vadd.f32 0.0, %v249
    %251 = vmatmul.f32.gmra.mxu0 %v212
    %v252 = vpop.f32.mrf.mxu0
    %v253 = vadd.f32 0.0, %v252
    %254 = vmatmul.f32.gmra.mxu0 %v215
    %v255 = vpop.f32.mrf.mxu0
    %v256 = vadd.f32 0.0, %v255
    %257 = vdwg.mxu0
    %v258 = vld [vmem:[%s2] sm:$0xff]
    %v259 = vld [vmem:[%s2 + $0x8] sm:$0xff]
    %v260 = vld [vmem:[%s2 + $0x10] sm:$0xff]
    %v261 = vld [vmem:[%s2 + $0x18] sm:$0xff]
    %v262 = vld [vmem:[%s2 + $0x20] sm:$0xff]
    %v263 = vld [vmem:[%s2 + $0x28] sm:$0xff]
    %v264 = vld [vmem:[%s2 + $0x30] sm:$0xff]
    %v265 = vld [vmem:[%s2 + $0x38] sm:$0xff]
    %v266 = vld [vmem:[%s3] sm:$0x3]
    %v268 = vperm.slane %v266, 0
    %v269 = vperm.slane %v266, 1
    %vm272 = vcmask 261120
    %v274 = vsel %vm272, %v235, 0
    %v277 = vsel %vm272, %v238, 0
    %v280 = vsel %vm272, %v241, 0
    %v283 = vsel %vm272, %v244, 0
    %v286 = vsel %vm272, %v247, 0
    %v289 = vsel %vm272, %v250, 0
    %v292 = vsel %vm272, %v253, 0
    %v295 = vsel %vm272, %v256, 0
    %297 = vmatpush.msra.mxu0 0.0
    %298 = vmatpush.msra.mxu0 0.0
    %299 = vmatpush.msra.mxu0 0.0
    %300 = vmatpush.msra.mxu0 0.0
    %301 = vmatpush.msra.mxu0 0.0
    %302 = vmatpush.msra.mxu0 0.0
    %303 = vmatpush.msra.mxu0 0.0
    %304 = vmatpush.msra.mxu0 0.0
    %305 = vmatpush.msra.mxu0 0.0
    %306 = vmatpush.msra.mxu0 0.0
    %307 = vmatpush.msra.mxu0 0.0
    %308 = vmatpush.msra.mxu0 0.0
    %309 = vmatpush.msra.mxu0 %v264
    %310 = vmatpush.msra.mxu0 %v262
    %311 = vmatpush.msra.mxu0 %v260
    %312 = vmatpush.msra.mxu0 %v258
    %313 = vmatmul.f32.gmra.mxu0 %v274
    %v314 = vpop.f32.mrf.mxu0
    %v315 = vadd.f32 %v268, %v314
    %316 = vmatmul.f32.gmra.mxu0 %v277
    %v317 = vpop.f32.mrf.mxu0
    %v318 = vadd.f32 %v268, %v317
    %319 = vmatmul.f32.gmra.mxu0 %v280
    %v320 = vpop.f32.mrf.mxu0
    %v321 = vadd.f32 %v268, %v320
    %322 = vmatmul.f32.gmra.mxu0 %v283
    %v323 = vpop.f32.mrf.mxu0
    %v324 = vadd.f32 %v268, %v323
    %325 = vmatmul.f32.gmra.mxu0 %v286
    %v326 = vpop.f32.mrf.mxu0
    %v327 = vadd.f32 %v268, %v326
    %328 = vmatmul.f32.gmra.mxu0 %v289
    %v329 = vpop.f32.mrf.mxu0
    %v330 = vadd.f32 %v268, %v329
    %331 = vmatmul.f32.gmra.mxu0 %v292
    %v332 = vpop.f32.mrf.mxu0
    %v333 = vadd.f32 %v268, %v332
    %334 = vmatmul.f32.gmra.mxu0 %v295
    %v335 = vpop.f32.mrf.mxu0
    %v336 = vadd.f32 %v268, %v335
    %337 = vdwg.mxu0
    %338 = vmatpush.msra.mxu0 0.0
    %339 = vmatpush.msra.mxu0 0.0
    %340 = vmatpush.msra.mxu0 0.0
    %341 = vmatpush.msra.mxu0 0.0
    %342 = vmatpush.msra.mxu0 0.0
    %343 = vmatpush.msra.mxu0 0.0
    %344 = vmatpush.msra.mxu0 0.0
    %345 = vmatpush.msra.mxu0 0.0
    %346 = vmatpush.msra.mxu0 0.0
    %347 = vmatpush.msra.mxu0 0.0
    %348 = vmatpush.msra.mxu0 0.0
    %349 = vmatpush.msra.mxu0 0.0
    %350 = vmatpush.msra.mxu0 %v265
    %351 = vmatpush.msra.mxu0 %v263
    %352 = vmatpush.msra.mxu0 %v261
    %353 = vmatpush.msra.mxu0 %v259
    %354 = vmatmul.f32.gmra.mxu0 %v274
    %v355 = vpop.f32.mrf.mxu0
    %v356 = vadd.f32 %v269, %v355
    %357 = vmatmul.f32.gmra.mxu0 %v277
    %v358 = vpop.f32.mrf.mxu0
    %v359 = vadd.f32 %v269, %v358
    %360 = vmatmul.f32.gmra.mxu0 %v280
    %v361 = vpop.f32.mrf.mxu0
    %v362 = vadd.f32 %v269, %v361
    %363 = vmatmul.f32.gmra.mxu0 %v283
    %v364 = vpop.f32.mrf.mxu0
    %v365 = vadd.f32 %v269, %v364
    %366 = vmatmul.f32.gmra.mxu0 %v286
    %v367 = vpop.f32.mrf.mxu0
    %v368 = vadd.f32 %v269, %v367
    %369 = vmatmul.f32.gmra.mxu0 %v289
    %v370 = vpop.f32.mrf.mxu0
    %v371 = vadd.f32 %v269, %v370
    %372 = vmatmul.f32.gmra.mxu0 %v292
    %v373 = vpop.f32.mrf.mxu0
    %v374 = vadd.f32 %v269, %v373
    %375 = vmatmul.f32.gmra.mxu0 %v295
    %v376 = vpop.f32.mrf.mxu0
    %v377 = vadd.f32 %v269, %v376
    %378 = vdwg.mxu0
    %v379 = vld [vmem:[%s4] sm:$0xff]
    %v380 = vld [vmem:[%s4 + $0x8] sm:$0xff]
    %v381 = vld [vmem:[%s4 + $0x10] sm:$0xff]
    %v382 = vld [vmem:[%s4 + $0x18] sm:$0xff]
    %v384 = vsel %vm272, 0.0, 0
    %386 = vmatpush.msra.mxu0 0.0
    %387 = vmatpush.msra.mxu0 0.0
    %388 = vmatpush.msra.mxu0 0.0
    %389 = vmatpush.msra.mxu0 0.0
    %390 = vmatpush.msra.mxu0 0.0
    %391 = vmatpush.msra.mxu0 0.0
    %392 = vmatpush.msra.mxu0 0.0
    %393 = vmatpush.msra.mxu0 0.0
    %394 = vmatpush.msra.mxu0 0.0
    %395 = vmatpush.msra.mxu0 0.0
    %396 = vmatpush.msra.mxu0 0.0
    %397 = vmatpush.msra.mxu0 0.0
    %398 = vmatpush.msra.mxu0 %v382
    %399 = vmatpush.msra.mxu0 %v381
    %400 = vmatpush.msra.mxu0 %v380
    %401 = vmatpush.msra.mxu0 %v379
    %402 = vmatmul.f32.gmra.mxu0 %v384
    %v403 = vpop.f32.mrf.mxu0
    %v404 = vadd.f32 0.0, %v403
    %405 = vdwg.mxu0
    %v406 = vadd.f32 %v315, %v404
    %v407 = vxor.u32 %v406, 2147483648
    %v408 = vmul.f32 %v407, 1.442695
    %v409 = vpow.pop %v408
    %v410 = vadd.f32 %v409, 1.0
    %v411 = vrcp.pop %v410
    %v412 = vmul.f32 %v410, %v411
    %v413 = vsub.f32 1.0, %v412
    %v414 = vmul.f32 %v411, %v413
    %v415 = vadd.f32 %v411, %v414
    %vm416 = vweird.f32 %v410
    %vm417 = vweird.f32 %v411
    %vm418 = vmor %vm416, %vm417
    %v419 = vsel %vm418, %v411, %v415
    %v420 = vand.u32 2147483647, %v410
    %vm421 = vcmp.eq.f32.partialorder %v420, 8.507059e+37
    %v422 = vand.u32 %v410, 2147483648
    %v423 = vor.u32 1.1754944e-38, %v422
    %v424 = vsel %vm421, %v423, %v419
    %v425 = vmul.f32 1.0, %v424
    %v426 = vtanh.pop %v406
    %v427 = vmul.f32 %v425, 0.0
    %429 = vrot.lane.b32.xlu0 %v426, 64
    %v430 = vpop.permute.xlu0 %429
    %v432 = vmul.f32 %v425, %v430
    %434 = vrot.lane.b32.xlu0 %v432, 32
    %v435 = vpop.permute.xlu0 %434
    %v437 = vadd.f32 %v427, %v435
    %v438 = vtanh.pop %v437
    %440 = vrot.lane.b32.xlu0 %v438, 64
    %v441 = vpop.permute.xlu0 %440
    %v443 = vmul.f32 %v425, %v441
    %445 = vrot.lane.b32.xlu0 %v443, 32
    %v446 = vpop.permute.xlu0 %445
    %v447 = vsel %vm272, %v446, 0
    %449 = vmatpush.msra.mxu0 0.0
    %450 = vmatpush.msra.mxu0 0.0
    %451 = vmatpush.msra.mxu0 0.0
    %452 = vmatpush.msra.mxu0 0.0
    %453 = vmatpush.msra.mxu0 0.0
    %454 = vmatpush.msra.mxu0 0.0
    %455 = vmatpush.msra.mxu0 0.0
    %456 = vmatpush.msra.mxu0 0.0
    %457 = vmatpush.msra.mxu0 0.0
    %458 = vmatpush.msra.mxu0 0.0
    %459 = vmatpush.msra.mxu0 0.0
    %460 = vmatpush.msra.mxu0 0.0
    %461 = vmatpush.msra.mxu0 %v382
    %462 = vmatpush.msra.mxu0 %v381
    %463 = vmatpush.msra.mxu0 %v380
    %464 = vmatpush.msra.mxu0 %v379
    %465 = vmatmul.f32.gmra.mxu0 %v447
    %v466 = vpop.f32.mrf.mxu0
    %v467 = vadd.f32 0.0, %v466
    %468 = vdwg.mxu0
    %v469 = vadd.f32 %v318, %v467
    %v470 = vxor.u32 %v469, 2147483648
    %v471 = vmul.f32 %v470, 1.442695
    %v472 = vpow.pop %v471
    %v473 = vadd.f32 %v472, 1.0
    %v474 = vrcp.pop %v473
    %v475 = vmul.f32 %v473, %v474
    %v476 = vsub.f32 1.0, %v475
    %v477 = vmul.f32 %v474, %v476
    %v478 = vadd.f32 %v474, %v477
    %vm479 = vweird.f32 %v473
    %vm480 = vweird.f32 %v474
    %vm481 = vmor %vm479, %vm480
    %v482 = vsel %vm481, %v474, %v478
    %v483 = vand.u32 2147483647, %v473
    %vm484 = vcmp.eq.f32.partialorder %v483, 8.507059e+37
    %v485 = vand.u32 %v473, 2147483648
    %v486 = vor.u32 1.1754944e-38, %v485
    %v487 = vsel %vm484, %v486, %v482
    %v488 = vmul.f32 1.0, %v487
    %v489 = vtanh.pop %v469
    %v490 = vmul.f32 %v488, %v437
    %492 = vrot.lane.b32.xlu0 %v489, 64
    %v493 = vpop.permute.xlu0 %492
    %v495 = vmul.f32 %v488, %v493
    %497 = vrot.lane.b32.xlu0 %v495, 32
    %v498 = vpop.permute.xlu0 %497
    %v500 = vadd.f32 %v490, %v498
    %v501 = vtanh.pop %v500
    %503 = vrot.lane.b32.xlu0 %v501, 64
    %v504 = vpop.permute.xlu0 %503
    %v506 = vmul.f32 %v488, %v504
    %508 = vrot.lane.b32.xlu0 %v506, 32
    %v509 = vpop.permute.xlu0 %508
    %v510 = vsel %vm272, %v509, 0
    %512 = vmatpush.msra.mxu0 0.0
    %513 = vmatpush.msra.mxu0 0.0
    %514 = vmatpush.msra.mxu0 0.0
    %515 = vmatpush.msra.mxu0 0.0
    %516 = vmatpush.msra.mxu0 0.0
    %517 = vmatpush.msra.mxu0 0.0
    %518 = vmatpush.msra.mxu0 0.0
    %519 = vmatpush.msra.mxu0 0.0
    %520 = vmatpush.msra.mxu0 0.0
    %521 = vmatpush.msra.mxu0 0.0
    %522 = vmatpush.msra.mxu0 0.0
    %523 = vmatpush.msra.mxu0 0.0
    %524 = vmatpush.msra.mxu0 %v382
    %525 = vmatpush.msra.mxu0 %v381
    %526 = vmatpush.msra.mxu0 %v380
    %527 = vmatpush.msra.mxu0 %v379
    %528 = vmatmul.f32.gmra.mxu0 %v510
    %v529 = vpop.f32.mrf.mxu0
    %v530 = vadd.f32 0.0, %v529
    %531 = vdwg.mxu0
    %v532 = vadd.f32 %v321, %v530
    %v533 = vxor.u32 %v532, 2147483648
    %v534 = vmul.f32 %v533, 1.442695
    %v535 = vpow.pop %v534
    %v536 = vadd.f32 %v535, 1.0
    %v537 = vrcp.pop %v536
    %v538 = vmul.f32 %v536, %v537
    %v539 = vsub.f32 1.0, %v538
    %v540 = vmul.f32 %v537, %v539
    %v541 = vadd.f32 %v537, %v540
    %vm542 = vweird.f32 %v536
    %vm543 = vweird.f32 %v537
    %vm544 = vmor %vm542, %vm543
    %v545 = vsel %vm544, %v537, %v541
    %v546 = vand.u32 2147483647, %v536
    %vm547 = vcmp.eq.f32.partialorder %v546, 8.507059e+37
    %v548 = vand.u32 %v536, 2147483648
    %v549 = vor.u32 1.1754944e-38, %v548
    %v550 = vsel %vm547, %v549, %v545
    %v551 = vmul.f32 1.0, %v550
    %v552 = vtanh.pop %v532
    %v553 = vmul.f32 %v551, %v500
    %555 = vrot.lane.b32.xlu0 %v552, 64
    %v556 = vpop.permute.xlu0 %555
    %v558 = vmul.f32 %v551, %v556
    %560 = vrot.lane.b32.xlu0 %v558, 32
    %v561 = vpop.permute.xlu0 %560
    %v563 = vadd.f32 %v553, %v561
    %v564 = vtanh.pop %v563
    %566 = vrot.lane.b32.xlu0 %v564, 64
    %v567 = vpop.permute.xlu0 %566
    %v569 = vmul.f32 %v551, %v567
    %571 = vrot.lane.b32.xlu0 %v569, 32
    %v572 = vpop.permute.xlu0 %571
    %v573 = vsel %vm272, %v572, 0
    %575 = vmatpush.msra.mxu0 0.0
    %576 = vmatpush.msra.mxu0 0.0
    %577 = vmatpush.msra.mxu0 0.0
    %578 = vmatpush.msra.mxu0 0.0
    %579 = vmatpush.msra.mxu0 0.0
    %580 = vmatpush.msra.mxu0 0.0
    %581 = vmatpush.msra.mxu0 0.0
    %582 = vmatpush.msra.mxu0 0.0
    %583 = vmatpush.msra.mxu0 0.0
    %584 = vmatpush.msra.mxu0 0.0
    %585 = vmatpush.msra.mxu0 0.0
    %586 = vmatpush.msra.mxu0 0.0
    %587 = vmatpush.msra.mxu0 %v382
    %588 = vmatpush.msra.mxu0 %v381
    %589 = vmatpush.msra.mxu0 %v380
    %590 = vmatpush.msra.mxu0 %v379
    %591 = vmatmul.f32.gmra.mxu0 %v573
    %v592 = vpop.f32.mrf.mxu0
    %v593 = vadd.f32 0.0, %v592
    %594 = vdwg.mxu0
    %v595 = vadd.f32 %v324, %v593
    %v596 = vxor.u32 %v595, 2147483648
    %v597 = vmul.f32 %v596, 1.442695
    %v598 = vpow.pop %v597
    %v599 = vadd.f32 %v598, 1.0
    %v600 = vrcp.pop %v599
    %v601 = vmul.f32 %v599, %v600
    %v602 = vsub.f32 1.0, %v601
    %v603 = vmul.f32 %v600, %v602
    %v604 = vadd.f32 %v600, %v603
    %vm605 = vweird.f32 %v599
    %vm606 = vweird.f32 %v600
    %vm607 = vmor %vm605, %vm606
    %v608 = vsel %vm607, %v600, %v604
    %v609 = vand.u32 2147483647, %v599
    %vm610 = vcmp.eq.f32.partialorder %v609, 8.507059e+37
    %v611 = vand.u32 %v599, 2147483648
    %v612 = vor.u32 1.1754944e-38, %v611
    %v613 = vsel %vm610, %v612, %v608
    %v614 = vmul.f32 1.0, %v613
    %v615 = vtanh.pop %v595
    %v616 = vmul.f32 %v614, %v563
    %618 = vrot.lane.b32.xlu0 %v615, 64
    %v619 = vpop.permute.xlu0 %618
    %v621 = vmul.f32 %v614, %v619
    %623 = vrot.lane.b32.xlu0 %v621, 32
    %v624 = vpop.permute.xlu0 %623
    %v626 = vadd.f32 %v616, %v624
    %v627 = vtanh.pop %v626
    %629 = vrot.lane.b32.xlu0 %v627, 64
    %v630 = vpop.permute.xlu0 %629
    %v632 = vmul.f32 %v614, %v630
    %634 = vrot.lane.b32.xlu0 %v632, 32
    %v635 = vpop.permute.xlu0 %634
    %v636 = vsel %vm272, %v635, 0
    %638 = vmatpush.msra.mxu0 0.0
    %639 = vmatpush.msra.mxu0 0.0
    %640 = vmatpush.msra.mxu0 0.0
    %641 = vmatpush.msra.mxu0 0.0
    %642 = vmatpush.msra.mxu0 0.0
    %643 = vmatpush.msra.mxu0 0.0
    %644 = vmatpush.msra.mxu0 0.0
    %645 = vmatpush.msra.mxu0 0.0
    %646 = vmatpush.msra.mxu0 0.0
    %647 = vmatpush.msra.mxu0 0.0
    %648 = vmatpush.msra.mxu0 0.0
    %649 = vmatpush.msra.mxu0 0.0
    %650 = vmatpush.msra.mxu0 %v382
    %651 = vmatpush.msra.mxu0 %v381
    %652 = vmatpush.msra.mxu0 %v380
    %653 = vmatpush.msra.mxu0 %v379
    %654 = vmatmul.f32.gmra.mxu0 %v636
    %v655 = vpop.f32.mrf.mxu0
    %v656 = vadd.f32 0.0, %v655
    %657 = vdwg.mxu0
    %v658 = vadd.f32 %v327, %v656
    %v659 = vxor.u32 %v658, 2147483648
    %v660 = vmul.f32 %v659, 1.442695
    %v661 = vpow.pop %v660
    %v662 = vadd.f32 %v661, 1.0
    %v663 = vrcp.pop %v662
    %v664 = vmul.f32 %v662, %v663
    %v665 = vsub.f32 1.0, %v664
    %v666 = vmul.f32 %v663, %v665
    %v667 = vadd.f32 %v663, %v666
    %vm668 = vweird.f32 %v662
    %vm669 = vweird.f32 %v663
    %vm670 = vmor %vm668, %vm669
    %v671 = vsel %vm670, %v663, %v667
    %v672 = vand.u32 2147483647, %v662
    %vm673 = vcmp.eq.f32.partialorder %v672, 8.507059e+37
    %v674 = vand.u32 %v662, 2147483648
    %v675 = vor.u32 1.1754944e-38, %v674
    %v676 = vsel %vm673, %v675, %v671
    %v677 = vmul.f32 1.0, %v676
    %v678 = vtanh.pop %v658
    %v679 = vmul.f32 %v677, %v626
    %681 = vrot.lane.b32.xlu0 %v678, 64
    %v682 = vpop.permute.xlu0 %681
    %v684 = vmul.f32 %v677, %v682
    %686 = vrot.lane.b32.xlu0 %v684, 32
    %v687 = vpop.permute.xlu0 %686
    %v689 = vadd.f32 %v679, %v687
    %v690 = vtanh.pop %v689
    %692 = vrot.lane.b32.xlu0 %v690, 64
    %v693 = vpop.permute.xlu0 %692
    %v695 = vmul.f32 %v677, %v693
    %697 = vrot.lane.b32.xlu0 %v695, 32
    %v698 = vpop.permute.xlu0 %697
    %v699 = vsel %vm272, %v698, 0
    %701 = vmatpush.msra.mxu0 0.0
    %702 = vmatpush.msra.mxu0 0.0
    %703 = vmatpush.msra.mxu0 0.0
    %704 = vmatpush.msra.mxu0 0.0
    %705 = vmatpush.msra.mxu0 0.0
    %706 = vmatpush.msra.mxu0 0.0
    %707 = vmatpush.msra.mxu0 0.0
    %708 = vmatpush.msra.mxu0 0.0
    %709 = vmatpush.msra.mxu0 0.0
    %710 = vmatpush.msra.mxu0 0.0
    %711 = vmatpush.msra.mxu0 0.0
    %712 = vmatpush.msra.mxu0 0.0
    %713 = vmatpush.msra.mxu0 %v382
    %714 = vmatpush.msra.mxu0 %v381
    %715 = vmatpush.msra.mxu0 %v380
    %716 = vmatpush.msra.mxu0 %v379
    %717 = vmatmul.f32.gmra.mxu0 %v699
    %v718 = vpop.f32.mrf.mxu0
    %v719 = vadd.f32 0.0, %v718
    %720 = vdwg.mxu0
    %v721 = vadd.f32 %v330, %v719
    %v722 = vxor.u32 %v721, 2147483648
    %v723 = vmul.f32 %v722, 1.442695
    %v724 = vpow.pop %v723
    %v725 = vadd.f32 %v724, 1.0
    %v726 = vrcp.pop %v725
    %v727 = vmul.f32 %v725, %v726
    %v728 = vsub.f32 1.0, %v727
    %v729 = vmul.f32 %v726, %v728
    %v730 = vadd.f32 %v726, %v729
    %vm731 = vweird.f32 %v725
    %vm732 = vweird.f32 %v726
    %vm733 = vmor %vm731, %vm732
    %v734 = vsel %vm733, %v726, %v730
    %v735 = vand.u32 2147483647, %v725
    %vm736 = vcmp.eq.f32.partialorder %v735, 8.507059e+37
    %v737 = vand.u32 %v725, 2147483648
    %v738 = vor.u32 1.1754944e-38, %v737
    %v739 = vsel %vm736, %v738, %v734
    %v740 = vmul.f32 1.0, %v739
    %v741 = vtanh.pop %v721
    %v742 = vmul.f32 %v740, %v689
    %744 = vrot.lane.b32.xlu0 %v741, 64
    %v745 = vpop.permute.xlu0 %744
    %v747 = vmul.f32 %v740, %v745
    %749 = vrot.lane.b32.xlu0 %v747, 32
    %v750 = vpop.permute.xlu0 %749
    %v752 = vadd.f32 %v742, %v750
    %v753 = vtanh.pop %v752
    %755 = vrot.lane.b32.xlu0 %v753, 64
    %v756 = vpop.permute.xlu0 %755
    %v758 = vmul.f32 %v740, %v756
    %760 = vrot.lane.b32.xlu0 %v758, 32
    %v761 = vpop.permute.xlu0 %760
    %v762 = vsel %vm272, %v761, 0
    %764 = vmatpush.msra.mxu0 0.0
    %765 = vmatpush.msra.mxu0 0.0
    %766 = vmatpush.msra.mxu0 0.0
    %767 = vmatpush.msra.mxu0 0.0
    %768 = vmatpush.msra.mxu0 0.0
    %769 = vmatpush.msra.mxu0 0.0
    %770 = vmatpush.msra.mxu0 0.0
    %771 = vmatpush.msra.mxu0 0.0
    %772 = vmatpush.msra.mxu0 0.0
    %773 = vmatpush.msra.mxu0 0.0
    %774 = vmatpush.msra.mxu0 0.0
    %775 = vmatpush.msra.mxu0 0.0
    %776 = vmatpush.msra.mxu0 %v382
    %777 = vmatpush.msra.mxu0 %v381
    %778 = vmatpush.msra.mxu0 %v380
    %779 = vmatpush.msra.mxu0 %v379
    %780 = vmatmul.f32.gmra.mxu0 %v762
    %v781 = vpop.f32.mrf.mxu0
    %v782 = vadd.f32 0.0, %v781
    %783 = vdwg.mxu0
    %v784 = vadd.f32 %v333, %v782
    %v785 = vxor.u32 %v784, 2147483648
    %v786 = vmul.f32 %v785, 1.442695
    %v787 = vpow.pop %v786
    %v788 = vadd.f32 %v787, 1.0
    %v789 = vrcp.pop %v788
    %v790 = vmul.f32 %v788, %v789
    %v791 = vsub.f32 1.0, %v790
    %v792 = vmul.f32 %v789, %v791
    %v793 = vadd.f32 %v789, %v792
    %vm794 = vweird.f32 %v788
    %vm795 = vweird.f32 %v789
    %vm796 = vmor %vm794, %vm795
    %v797 = vsel %vm796, %v789, %v793
    %v798 = vand.u32 2147483647, %v788
    %vm799 = vcmp.eq.f32.partialorder %v798, 8.507059e+37
    %v800 = vand.u32 %v788, 2147483648
    %v801 = vor.u32 1.1754944e-38, %v800
    %v802 = vsel %vm799, %v801, %v797
    %v803 = vmul.f32 1.0, %v802
    %v804 = vtanh.pop %v784
    %v805 = vmul.f32 %v803, %v752
    %807 = vrot.lane.b32.xlu0 %v804, 64
    %v808 = vpop.permute.xlu0 %807
    %v810 = vmul.f32 %v803, %v808
    %812 = vrot.lane.b32.xlu0 %v810, 32
    %v813 = vpop.permute.xlu0 %812
    %v815 = vadd.f32 %v805, %v813
    %v816 = vtanh.pop %v815
    %818 = vrot.lane.b32.xlu0 %v816, 64
    %v819 = vpop.permute.xlu0 %818
    %v821 = vmul.f32 %v803, %v819
    %823 = vrot.lane.b32.xlu0 %v821, 32
    %v824 = vpop.permute.xlu0 %823
    %v825 = vsel %vm272, %v824, 0
    %827 = vmatpush.msra.mxu0 0.0
    %828 = vmatpush.msra.mxu0 0.0
    %829 = vmatpush.msra.mxu0 0.0
    %830 = vmatpush.msra.mxu0 0.0
    %831 = vmatpush.msra.mxu0 0.0
    %832 = vmatpush.msra.mxu0 0.0
    %833 = vmatpush.msra.mxu0 0.0
    %834 = vmatpush.msra.mxu0 0.0
    %835 = vmatpush.msra.mxu0 0.0
    %836 = vmatpush.msra.mxu0 0.0
    %837 = vmatpush.msra.mxu0 0.0
    %838 = vmatpush.msra.mxu0 0.0
    %839 = vmatpush.msra.mxu0 %v382
    %840 = vmatpush.msra.mxu0 %v381
    %841 = vmatpush.msra.mxu0 %v380
    %842 = vmatpush.msra.mxu0 %v379
    %843 = vmatmul.f32.gmra.mxu0 %v825
    %v844 = vpop.f32.mrf.mxu0
    %v845 = vadd.f32 0.0, %v844
    %846 = vdwg.mxu0
    %v847 = vadd.f32 %v336, %v845
    %v848 = vxor.u32 %v847, 2147483648
    %v849 = vmul.f32 %v848, 1.442695
    %v850 = vpow.pop %v849
    %v851 = vadd.f32 %v850, 1.0
    %v852 = vrcp.pop %v851
    %v853 = vmul.f32 %v851, %v852
    %v854 = vsub.f32 1.0, %v853
    %v855 = vmul.f32 %v852, %v854
    %v856 = vadd.f32 %v852, %v855
    %vm857 = vweird.f32 %v851
    %vm858 = vweird.f32 %v852
    %vm859 = vmor %vm857, %vm858
    %v860 = vsel %vm859, %v852, %v856
    %v861 = vand.u32 2147483647, %v851
    %vm862 = vcmp.eq.f32.partialorder %v861, 8.507059e+37
    %v863 = vand.u32 %v851, 2147483648
    %v864 = vor.u32 1.1754944e-38, %v863
    %v865 = vsel %vm862, %v864, %v860
    %v866 = vmul.f32 1.0, %v865
    %v867 = vtanh.pop %v847
    %v868 = vmul.f32 %v866, %v815
    %870 = vrot.lane.b32.xlu0 %v867, 64
    %v871 = vpop.permute.xlu0 %870
    %v873 = vmul.f32 %v866, %v871
    %875 = vrot.lane.b32.xlu0 %v873, 32
    %v876 = vpop.permute.xlu0 %875
    %v878 = vadd.f32 %v868, %v876
    %v879 = vtanh.pop %v878
    %881 = vrot.lane.b32.xlu0 %v879, 64
    %v882 = vpop.permute.xlu0 %881
    %v884 = vmul.f32 %v866, %v882
    %v885 = vld [vmem:[#allocation2] sm:$0xff]
    %v886 = vld [vmem:[#allocation2 + $0x8] sm:$0xff]
    %v887 = vld [vmem:[#allocation2 + $0x10] sm:$0xff]
    %v888 = vld [vmem:[#allocation2 + $0x18] sm:$0xff]
    %889 = vmatpush.msra.mxu0 0.0
    %890 = vmatpush.msra.mxu0 0.0
    %891 = vmatpush.msra.mxu0 0.0
    %892 = vmatpush.msra.mxu0 0.0
    %893 = vmatpush.msra.mxu0 0.0
    %894 = vmatpush.msra.mxu0 0.0
    %895 = vmatpush.msra.mxu0 0.0
    %896 = vmatpush.msra.mxu0 0.0
    %897 = vmatpush.msra.mxu0 0.0
    %898 = vmatpush.msra.mxu0 0.0
    %899 = vmatpush.msra.mxu0 0.0
    %900 = vmatpush.msra.mxu0 0.0
    %901 = vmatpush.msra.mxu0 %v888
    %902 = vmatpush.msra.mxu0 %v887
    %903 = vmatpush.msra.mxu0 %v886
    %904 = vmatpush.msra.mxu0 %v885
    %905 = vmatmul.f32.gmra.mxu0 %v384
    %v906 = vpop.f32.mrf.mxu0
    %v907 = vadd.f32 0.0, %v906
    %908 = vdwg.mxu0
    %v909 = vadd.f32 %v377, %v907
    %v910 = vxor.u32 %v909, 2147483648
    %v911 = vmul.f32 %v910, 1.442695
    %v912 = vpow.pop %v911
    %v913 = vadd.f32 %v912, 1.0
    %v914 = vrcp.pop %v913
    %v915 = vmul.f32 %v913, %v914
    %v916 = vsub.f32 1.0, %v915
    %v917 = vmul.f32 %v914, %v916
    %v918 = vadd.f32 %v914, %v917
    %vm919 = vweird.f32 %v913
    %vm920 = vweird.f32 %v914
    %vm921 = vmor %vm919, %vm920
    %v922 = vsel %vm921, %v914, %v918
    %v923 = vand.u32 2147483647, %v913
    %vm924 = vcmp.eq.f32.partialorder %v923, 8.507059e+37
    %v925 = vand.u32 %v913, 2147483648
    %v926 = vor.u32 1.1754944e-38, %v925
    %v927 = vsel %vm924, %v926, %v922
    %v928 = vmul.f32 1.0, %v927
    %v929 = vtanh.pop %v909
    %v930 = vmul.f32 %v928, 0.0
    %932 = vrot.lane.b32.xlu0 %v929, 64
    %v933 = vpop.permute.xlu0 %932
    %v935 = vmul.f32 %v928, %v933
    %937 = vrot.lane.b32.xlu0 %v935, 32
    %v938 = vpop.permute.xlu0 %937
    %v940 = vadd.f32 %v930, %v938
    %v941 = vtanh.pop %v940
    %943 = vrot.lane.b32.xlu0 %v941, 64
    %v944 = vpop.permute.xlu0 %943
    %v946 = vmul.f32 %v928, %v944
    %948 = vrot.lane.b32.xlu0 %v946, 32
    %v949 = vpop.permute.xlu0 %948
    %v950 = vsel %vm272, %v949, 0
    %952 = vmatpush.msra.mxu0 0.0
    %953 = vmatpush.msra.mxu0 0.0
    %954 = vmatpush.msra.mxu0 0.0
    %955 = vmatpush.msra.mxu0 0.0
    %956 = vmatpush.msra.mxu0 0.0
    %957 = vmatpush.msra.mxu0 0.0
    %958 = vmatpush.msra.mxu0 0.0
    %959 = vmatpush.msra.mxu0 0.0
    %960 = vmatpush.msra.mxu0 0.0
    %961 = vmatpush.msra.mxu0 0.0
    %962 = vmatpush.msra.mxu0 0.0
    %963 = vmatpush.msra.mxu0 0.0
    %964 = vmatpush.msra.mxu0 %v888
    %965 = vmatpush.msra.mxu0 %v887
    %966 = vmatpush.msra.mxu0 %v886
    %967 = vmatpush.msra.mxu0 %v885
    %968 = vmatmul.f32.gmra.mxu0 %v950
    %v969 = vpop.f32.mrf.mxu0
    %v970 = vadd.f32 0.0, %v969
    %971 = vdwg.mxu0
    %v972 = vadd.f32 %v374, %v970
    %v973 = vxor.u32 %v972, 2147483648
    %v974 = vmul.f32 %v973, 1.442695
    %v975 = vpow.pop %v974
    %v976 = vadd.f32 %v975, 1.0
    %v977 = vrcp.pop %v976
    %v978 = vmul.f32 %v976, %v977
    %v979 = vsub.f32 1.0, %v978
    %v980 = vmul.f32 %v977, %v979
    %v981 = vadd.f32 %v977, %v980
    %vm982 = vweird.f32 %v976
    %vm983 = vweird.f32 %v977
    %vm984 = vmor %vm982, %vm983
    %v985 = vsel %vm984, %v977, %v981
    %v986 = vand.u32 2147483647, %v976
    %vm987 = vcmp.eq.f32.partialorder %v986, 8.507059e+37
    %v988 = vand.u32 %v976, 2147483648
    %v989 = vor.u32 1.1754944e-38, %v988
    %v990 = vsel %vm987, %v989, %v985
    %v991 = vmul.f32 1.0, %v990
    %v992 = vtanh.pop %v972
    %v993 = vmul.f32 %v991, %v940
    %995 = vrot.lane.b32.xlu0 %v992, 64
    %v996 = vpop.permute.xlu0 %995
    %v998 = vmul.f32 %v991, %v996
    %1000 = vrot.lane.b32.xlu0 %v998, 32
    %v1001 = vpop.permute.xlu0 %1000
    %v1003 = vadd.f32 %v993, %v1001
    %v1004 = vtanh.pop %v1003
    %1006 = vrot.lane.b32.xlu0 %v1004, 64
    %v1007 = vpop.permute.xlu0 %1006
    %v1009 = vmul.f32 %v991, %v1007
    %1011 = vrot.lane.b32.xlu0 %v1009, 32
    %v1012 = vpop.permute.xlu0 %1011
    %v1013 = vsel %vm272, %v1012, 0
    %1015 = vmatpush.msra.mxu0 0.0
    %1016 = vmatpush.msra.mxu0 0.0
    %1017 = vmatpush.msra.mxu0 0.0
    %1018 = vmatpush.msra.mxu0 0.0
    %1019 = vmatpush.msra.mxu0 0.0
    %1020 = vmatpush.msra.mxu0 0.0
    %1021 = vmatpush.msra.mxu0 0.0
    %1022 = vmatpush.msra.mxu0 0.0
    %1023 = vmatpush.msra.mxu0 0.0
    %1024 = vmatpush.msra.mxu0 0.0
    %1025 = vmatpush.msra.mxu0 0.0
    %1026 = vmatpush.msra.mxu0 0.0
    %1027 = vmatpush.msra.mxu0 %v888
    %1028 = vmatpush.msra.mxu0 %v887
    %1029 = vmatpush.msra.mxu0 %v886
    %1030 = vmatpush.msra.mxu0 %v885
    %1031 = vmatmul.f32.gmra.mxu0 %v1013
    %v1032 = vpop.f32.mrf.mxu0
    %v1033 = vadd.f32 0.0, %v1032
    %1034 = vdwg.mxu0
    %v1035 = vadd.f32 %v371, %v1033
    %v1036 = vxor.u32 %v1035, 2147483648
    %v1037 = vmul.f32 %v1036, 1.442695
    %v1038 = vpow.pop %v1037
    %v1039 = vadd.f32 %v1038, 1.0
    %v1040 = vrcp.pop %v1039
    %v1041 = vmul.f32 %v1039, %v1040
    %v1042 = vsub.f32 1.0, %v1041
    %v1043 = vmul.f32 %v1040, %v1042
    %v1044 = vadd.f32 %v1040, %v1043
    %vm1045 = vweird.f32 %v1039
    %vm1046 = vweird.f32 %v1040
    %vm1047 = vmor %vm1045, %vm1046
    %v1048 = vsel %vm1047, %v1040, %v1044
    %v1049 = vand.u32 2147483647, %v1039
    %vm1050 = vcmp.eq.f32.partialorder %v1049, 8.507059e+37
    %v1051 = vand.u32 %v1039, 2147483648
    %v1052 = vor.u32 1.1754944e-38, %v1051
    %v1053 = vsel %vm1050, %v1052, %v1048
    %v1054 = vmul.f32 1.0, %v1053
    %v1055 = vtanh.pop %v1035
    %v1056 = vmul.f32 %v1054, %v1003
    %1058 = vrot.lane.b32.xlu0 %v1055, 64
    %v1059 = vpop.permute.xlu0 %1058
    %v1061 = vmul.f32 %v1054, %v1059
    %1063 = vrot.lane.b32.xlu0 %v1061, 32
    %v1064 = vpop.permute.xlu0 %1063
    %v1066 = vadd.f32 %v1056, %v1064
    %v1067 = vtanh.pop %v1066
    %1069 = vrot.lane.b32.xlu0 %v1067, 64
    %v1070 = vpop.permute.xlu0 %1069
    %v1072 = vmul.f32 %v1054, %v1070
    %1074 = vrot.lane.b32.xlu0 %v1072, 32
    %v1075 = vpop.permute.xlu0 %1074
    %v1076 = vsel %vm272, %v1075, 0
    %1078 = vmatpush.msra.mxu0 0.0
    %1079 = vmatpush.msra.mxu0 0.0
    %1080 = vmatpush.msra.mxu0 0.0
    %1081 = vmatpush.msra.mxu0 0.0
    %1082 = vmatpush.msra.mxu0 0.0
    %1083 = vmatpush.msra.mxu0 0.0
    %1084 = vmatpush.msra.mxu0 0.0
    %1085 = vmatpush.msra.mxu0 0.0
    %1086 = vmatpush.msra.mxu0 0.0
    %1087 = vmatpush.msra.mxu0 0.0
    %1088 = vmatpush.msra.mxu0 0.0
    %1089 = vmatpush.msra.mxu0 0.0
    %1090 = vmatpush.msra.mxu0 %v888
    %1091 = vmatpush.msra.mxu0 %v887
    %1092 = vmatpush.msra.mxu0 %v886
    %1093 = vmatpush.msra.mxu0 %v885
    %1094 = vmatmul.f32.gmra.mxu0 %v1076
    %v1095 = vpop.f32.mrf.mxu0
    %v1096 = vadd.f32 0.0, %v1095
    %1097 = vdwg.mxu0
    %v1098 = vadd.f32 %v368, %v1096
    %v1099 = vxor.u32 %v1098, 2147483648
    %v1100 = vmul.f32 %v1099, 1.442695
    %v1101 = vpow.pop %v1100
    %v1102 = vadd.f32 %v1101, 1.0
    %v1103 = vrcp.pop %v1102
    %v1104 = vmul.f32 %v1102, %v1103
    %v1105 = vsub.f32 1.0, %v1104
    %v1106 = vmul.f32 %v1103, %v1105
    %v1107 = vadd.f32 %v1103, %v1106
    %vm1108 = vweird.f32 %v1102
    %vm1109 = vweird.f32 %v1103
    %vm1110 = vmor %vm1108, %vm1109
    %v1111 = vsel %vm1110, %v1103, %v1107
    %v1112 = vand.u32 2147483647, %v1102
    %vm1113 = vcmp.eq.f32.partialorder %v1112, 8.507059e+37
    %v1114 = vand.u32 %v1102, 2147483648
    %v1115 = vor.u32 1.1754944e-38, %v1114
    %v1116 = vsel %vm1113, %v1115, %v1111
    %v1117 = vmul.f32 1.0, %v1116
    %v1118 = vtanh.pop %v1098
    %v1119 = vmul.f32 %v1117, %v1066
    %1121 = vrot.lane.b32.xlu0 %v1118, 64
    %v1122 = vpop.permute.xlu0 %1121
    %v1124 = vmul.f32 %v1117, %v1122
    %1126 = vrot.lane.b32.xlu0 %v1124, 32
    %v1127 = vpop.permute.xlu0 %1126
    %v1129 = vadd.f32 %v1119, %v1127
    %v1130 = vtanh.pop %v1129
    %1132 = vrot.lane.b32.xlu0 %v1130, 64
    %v1133 = vpop.permute.xlu0 %1132
    %v1135 = vmul.f32 %v1117, %v1133
    %1137 = vrot.lane.b32.xlu0 %v1135, 32
    %v1138 = vpop.permute.xlu0 %1137
    %v1139 = vsel %vm272, %v1138, 0
    %1141 = vmatpush.msra.mxu0 0.0
    %1142 = vmatpush.msra.mxu0 0.0
    %1143 = vmatpush.msra.mxu0 0.0
    %1144 = vmatpush.msra.mxu0 0.0
    %1145 = vmatpush.msra.mxu0 0.0
    %1146 = vmatpush.msra.mxu0 0.0
    %1147 = vmatpush.msra.mxu0 0.0
    %1148 = vmatpush.msra.mxu0 0.0
    %1149 = vmatpush.msra.mxu0 0.0
    %1150 = vmatpush.msra.mxu0 0.0
    %1151 = vmatpush.msra.mxu0 0.0
    %1152 = vmatpush.msra.mxu0 0.0
    %1153 = vmatpush.msra.mxu0 %v888
    %1154 = vmatpush.msra.mxu0 %v887
    %1155 = vmatpush.msra.mxu0 %v886
    %1156 = vmatpush.msra.mxu0 %v885
    %1157 = vmatmul.f32.gmra.mxu0 %v1139
    %v1158 = vpop.f32.mrf.mxu0
    %v1159 = vadd.f32 0.0, %v1158
    %1160 = vdwg.mxu0
    %v1161 = vadd.f32 %v365, %v1159
    %v1162 = vxor.u32 %v1161, 2147483648
    %v1163 = vmul.f32 %v1162, 1.442695
    %v1164 = vpow.pop %v1163
    %v1165 = vadd.f32 %v1164, 1.0
    %v1166 = vrcp.pop %v1165
    %v1167 = vmul.f32 %v1165, %v1166
    %v1168 = vsub.f32 1.0, %v1167
    %v1169 = vmul.f32 %v1166, %v1168
    %v1170 = vadd.f32 %v1166, %v1169
    %vm1171 = vweird.f32 %v1165
    %vm1172 = vweird.f32 %v1166
    %vm1173 = vmor %vm1171, %vm1172
    %v1174 = vsel %vm1173, %v1166, %v1170
    %v1175 = vand.u32 2147483647, %v1165
    %vm1176 = vcmp.eq.f32.partialorder %v1175, 8.507059e+37
    %v1177 = vand.u32 %v1165, 2147483648
    %v1178 = vor.u32 1.1754944e-38, %v1177
    %v1179 = vsel %vm1176, %v1178, %v1174
    %v1180 = vmul.f32 1.0, %v1179
    %v1181 = vtanh.pop %v1161
    %v1182 = vmul.f32 %v1180, %v1129
    %1184 = vrot.lane.b32.xlu0 %v1181, 64
    %v1185 = vpop.permute.xlu0 %1184
    %v1187 = vmul.f32 %v1180, %v1185
    %1189 = vrot.lane.b32.xlu0 %v1187, 32
    %v1190 = vpop.permute.xlu0 %1189
    %v1192 = vadd.f32 %v1182, %v1190
    %v1193 = vtanh.pop %v1192
    %1195 = vrot.lane.b32.xlu0 %v1193, 64
    %v1196 = vpop.permute.xlu0 %1195
    %v1198 = vmul.f32 %v1180, %v1196
    %1200 = vrot.lane.b32.xlu0 %v1198, 32
    %v1201 = vpop.permute.xlu0 %1200
    %v1202 = vsel %vm272, %v1201, 0
    %1204 = vmatpush.msra.mxu0 0.0
    %1205 = vmatpush.msra.mxu0 0.0
    %1206 = vmatpush.msra.mxu0 0.0
    %1207 = vmatpush.msra.mxu0 0.0
    %1208 = vmatpush.msra.mxu0 0.0
    %1209 = vmatpush.msra.mxu0 0.0
    %1210 = vmatpush.msra.mxu0 0.0
    %1211 = vmatpush.msra.mxu0 0.0
    %1212 = vmatpush.msra.mxu0 0.0
    %1213 = vmatpush.msra.mxu0 0.0
    %1214 = vmatpush.msra.mxu0 0.0
    %1215 = vmatpush.msra.mxu0 0.0
    %1216 = vmatpush.msra.mxu0 %v888
    %1217 = vmatpush.msra.mxu0 %v887
    %1218 = vmatpush.msra.mxu0 %v886
    %1219 = vmatpush.msra.mxu0 %v885
    %1220 = vmatmul.f32.gmra.mxu0 %v1202
    %v1221 = vpop.f32.mrf.mxu0
    %v1222 = vadd.f32 0.0, %v1221
    %1223 = vdwg.mxu0
    %v1224 = vadd.f32 %v362, %v1222
    %v1225 = vxor.u32 %v1224, 2147483648
    %v1226 = vmul.f32 %v1225, 1.442695
    %v1227 = vpow.pop %v1226
    %v1228 = vadd.f32 %v1227, 1.0
    %v1229 = vrcp.pop %v1228
    %v1230 = vmul.f32 %v1228, %v1229
    %v1231 = vsub.f32 1.0, %v1230
    %v1232 = vmul.f32 %v1229, %v1231
    %v1233 = vadd.f32 %v1229, %v1232
    %vm1234 = vweird.f32 %v1228
    %vm1235 = vweird.f32 %v1229
    %vm1236 = vmor %vm1234, %vm1235
    %v1237 = vsel %vm1236, %v1229, %v1233
    %v1238 = vand.u32 2147483647, %v1228
    %vm1239 = vcmp.eq.f32.partialorder %v1238, 8.507059e+37
    %v1240 = vand.u32 %v1228, 2147483648
    %v1241 = vor.u32 1.1754944e-38, %v1240
    %v1242 = vsel %vm1239, %v1241, %v1237
    %v1243 = vmul.f32 1.0, %v1242
    %v1244 = vtanh.pop %v1224
    %v1245 = vmul.f32 %v1243, %v1192
    %1247 = vrot.lane.b32.xlu0 %v1244, 64
    %v1248 = vpop.permute.xlu0 %1247
    %v1250 = vmul.f32 %v1243, %v1248
    %1252 = vrot.lane.b32.xlu0 %v1250, 32
    %v1253 = vpop.permute.xlu0 %1252
    %v1255 = vadd.f32 %v1245, %v1253
    %v1256 = vtanh.pop %v1255
    %1258 = vrot.lane.b32.xlu0 %v1256, 64
    %v1259 = vpop.permute.xlu0 %1258
    %v1261 = vmul.f32 %v1243, %v1259
    %1263 = vrot.lane.b32.xlu0 %v1261, 32
    %v1264 = vpop.permute.xlu0 %1263
    %v1265 = vsel %vm272, %v1264, 0
    %1267 = vmatpush.msra.mxu0 0.0
    %1268 = vmatpush.msra.mxu0 0.0
    %1269 = vmatpush.msra.mxu0 0.0
    %1270 = vmatpush.msra.mxu0 0.0
    %1271 = vmatpush.msra.mxu0 0.0
    %1272 = vmatpush.msra.mxu0 0.0
    %1273 = vmatpush.msra.mxu0 0.0
    %1274 = vmatpush.msra.mxu0 0.0
    %1275 = vmatpush.msra.mxu0 0.0
    %1276 = vmatpush.msra.mxu0 0.0
    %1277 = vmatpush.msra.mxu0 0.0
    %1278 = vmatpush.msra.mxu0 0.0
    %1279 = vmatpush.msra.mxu0 %v888
    %1280 = vmatpush.msra.mxu0 %v887
    %1281 = vmatpush.msra.mxu0 %v886
    %1282 = vmatpush.msra.mxu0 %v885
    %1283 = vmatmul.f32.gmra.mxu0 %v1265
    %v1284 = vpop.f32.mrf.mxu0
    %v1285 = vadd.f32 0.0, %v1284
    %1286 = vdwg.mxu0
    %v1287 = vadd.f32 %v359, %v1285
    %v1288 = vxor.u32 %v1287, 2147483648
    %v1289 = vmul.f32 %v1288, 1.442695
    %v1290 = vpow.pop %v1289
    %v1291 = vadd.f32 %v1290, 1.0
    %v1292 = vrcp.pop %v1291
    %v1293 = vmul.f32 %v1291, %v1292
    %v1294 = vsub.f32 1.0, %v1293
    %v1295 = vmul.f32 %v1292, %v1294
    %v1296 = vadd.f32 %v1292, %v1295
    %vm1297 = vweird.f32 %v1291
    %vm1298 = vweird.f32 %v1292
    %vm1299 = vmor %vm1297, %vm1298
    %v1300 = vsel %vm1299, %v1292, %v1296
    %v1301 = vand.u32 2147483647, %v1291
    %vm1302 = vcmp.eq.f32.partialorder %v1301, 8.507059e+37
    %v1303 = vand.u32 %v1291, 2147483648
    %v1304 = vor.u32 1.1754944e-38, %v1303
    %v1305 = vsel %vm1302, %v1304, %v1300
    %v1306 = vmul.f32 1.0, %v1305
    %v1307 = vtanh.pop %v1287
    %v1308 = vmul.f32 %v1306, %v1255
    %1310 = vrot.lane.b32.xlu0 %v1307, 64
    %v1311 = vpop.permute.xlu0 %1310
    %v1313 = vmul.f32 %v1306, %v1311
    %1315 = vrot.lane.b32.xlu0 %v1313, 32
    %v1316 = vpop.permute.xlu0 %1315
    %v1318 = vadd.f32 %v1308, %v1316
    %v1319 = vtanh.pop %v1318
    %1321 = vrot.lane.b32.xlu0 %v1319, 64
    %v1322 = vpop.permute.xlu0 %1321
    %v1324 = vmul.f32 %v1306, %v1322
    %1326 = vrot.lane.b32.xlu0 %v1324, 32
    %v1327 = vpop.permute.xlu0 %1326
    %v1328 = vsel %vm272, %v1327, 0
    %1330 = vmatpush.msra.mxu0 0.0
    %1331 = vmatpush.msra.mxu0 0.0
    %1332 = vmatpush.msra.mxu0 0.0
    %1333 = vmatpush.msra.mxu0 0.0
    %1334 = vmatpush.msra.mxu0 0.0
    %1335 = vmatpush.msra.mxu0 0.0
    %1336 = vmatpush.msra.mxu0 0.0
    %1337 = vmatpush.msra.mxu0 0.0
    %1338 = vmatpush.msra.mxu0 0.0
    %1339 = vmatpush.msra.mxu0 0.0
    %1340 = vmatpush.msra.mxu0 0.0
    %1341 = vmatpush.msra.mxu0 0.0
    %1342 = vmatpush.msra.mxu0 %v888
    %1343 = vmatpush.msra.mxu0 %v887
    %1344 = vmatpush.msra.mxu0 %v886
    %1345 = vmatpush.msra.mxu0 %v885
    %1346 = vmatmul.f32.gmra.mxu0 %v1328
    %v1347 = vpop.f32.mrf.mxu0
    %v1348 = vadd.f32 0.0, %v1347
    %1349 = vdwg.mxu0
    %v1350 = vadd.f32 %v356, %v1348
    %v1351 = vxor.u32 %v1350, 2147483648
    %v1352 = vmul.f32 %v1351, 1.442695
    %v1353 = vpow.pop %v1352
    %v1354 = vadd.f32 %v1353, 1.0
    %v1355 = vrcp.pop %v1354
    %v1356 = vmul.f32 %v1354, %v1355
    %v1357 = vsub.f32 1.0, %v1356
    %v1358 = vmul.f32 %v1355, %v1357
    %v1359 = vadd.f32 %v1355, %v1358
    %vm1360 = vweird.f32 %v1354
    %vm1361 = vweird.f32 %v1355
    %vm1362 = vmor %vm1360, %vm1361
    %v1363 = vsel %vm1362, %v1355, %v1359
    %v1364 = vand.u32 2147483647, %v1354
    %vm1365 = vcmp.eq.f32.partialorder %v1364, 8.507059e+37
    %v1366 = vand.u32 %v1354, 2147483648
    %v1367 = vor.u32 1.1754944e-38, %v1366
    %v1368 = vsel %vm1365, %v1367, %v1363
    %v1369 = vmul.f32 1.0, %v1368
    %v1370 = vtanh.pop %v1350
    %v1371 = vmul.f32 %v1369, %v1318
    %1373 = vrot.lane.b32.xlu0 %v1370, 64
    %v1374 = vpop.permute.xlu0 %1373
    %v1376 = vmul.f32 %v1369, %v1374
    %1378 = vrot.lane.b32.xlu0 %v1376, 32
    %v1379 = vpop.permute.xlu0 %1378
    %v1381 = vadd.f32 %v1371, %v1379
    %v1382 = vtanh.pop %v1381
    %1384 = vrot.lane.b32.xlu0 %v1382, 64
    %v1385 = vpop.permute.xlu0 %1384
    %v1387 = vmul.f32 %v1369, %v1385
    %v1388 = vld [vmem:[%s6] sm:$0xff]
    %v1389 = vld [vmem:[%s6 + $0x8] sm:$0xff]
    %v1390 = vld [vmem:[%s6 + $0x10] sm:$0xff]
    %v1391 = vld [vmem:[%s6 + $0x18] sm:$0xff]
    %v1392 = vld [vmem:[%s6 + $0x20] sm:$0xff]
    %v1393 = vld [vmem:[%s6 + $0x28] sm:$0xff]
    %v1394 = vld [vmem:[%s6 + $0x30] sm:$0xff]
    %v1395 = vld [vmem:[%s6 + $0x38] sm:$0xff]
    %v1396 = vld [vmem:[#allocation5] sm:$0xff]
    %v1397 = vld [vmem:[#allocation5 + $0x8] sm:$0xff]
    %v1398 = vld [vmem:[#allocation5 + $0x10] sm:$0xff]
    %v1399 = vld [vmem:[#allocation5 + $0x18] sm:$0xff]
    %v1400 = vld [vmem:[#allocation5 + $0x20] sm:$0xff]
    %v1401 = vld [vmem:[#allocation5 + $0x28] sm:$0xff]
    %v1402 = vld [vmem:[#allocation5 + $0x30] sm:$0xff]
    %v1403 = vld [vmem:[#allocation5 + $0x38] sm:$0xff]
    %1405 = vrot.lane.b32.xlu0 %v1387, 32
    %v1406 = vpop.permute.xlu0 %1405
    %v1407 = vsel %vm272, %v1406, 0
    %1409 = vmatpush.msra.mxu0 0.0
    %1410 = vmatpush.msra.mxu0 0.0
    %1411 = vmatpush.msra.mxu0 0.0
    %1412 = vmatpush.msra.mxu0 0.0
    %1413 = vmatpush.msra.mxu0 0.0
    %1414 = vmatpush.msra.mxu0 0.0
    %1415 = vmatpush.msra.mxu0 0.0
    %1416 = vmatpush.msra.mxu0 0.0
    %1417 = vmatpush.msra.mxu0 0.0
    %1418 = vmatpush.msra.mxu0 0.0
    %1419 = vmatpush.msra.mxu0 0.0
    %1420 = vmatpush.msra.mxu0 0.0
    %1421 = vmatpush.msra.mxu0 %v1402
    %1422 = vmatpush.msra.mxu0 %v1400
    %1423 = vmatpush.msra.mxu0 %v1398
    %1424 = vmatpush.msra.mxu0 %v1396
    %1425 = vmatmul.f32.gmra.mxu0 %v1407
    %v1426 = vpop.f32.mrf.mxu0
    %v1427 = vadd.f32 0.0, %v1426
    %1428 = vmatmul.f32.gmra.mxu0 %v1328
    %v1429 = vpop.f32.mrf.mxu0
    %v1430 = vadd.f32 0.0, %v1429
    %1431 = vmatmul.f32.gmra.mxu0 %v1265
    %v1432 = vpop.f32.mrf.mxu0
    %v1433 = vadd.f32 0.0, %v1432
    %1434 = vmatmul.f32.gmra.mxu0 %v1202
    %v1435 = vpop.f32.mrf.mxu0
    %v1436 = vadd.f32 0.0, %v1435
    %1437 = vmatmul.f32.gmra.mxu0 %v1139
    %v1438 = vpop.f32.mrf.mxu0
    %v1439 = vadd.f32 0.0, %v1438
    %1440 = vmatmul.f32.gmra.mxu0 %v1076
    %v1441 = vpop.f32.mrf.mxu0
    %v1442 = vadd.f32 0.0, %v1441
    %1443 = vmatmul.f32.gmra.mxu0 %v1013
    %v1444 = vpop.f32.mrf.mxu0
    %v1445 = vadd.f32 0.0, %v1444
    %1446 = vmatmul.f32.gmra.mxu0 %v950
    %v1447 = vpop.f32.mrf.mxu0
    %v1448 = vadd.f32 0.0, %v1447
    %1449 = vdwg.mxu0
    %1450 = vmatpush.msra.mxu0 0.0
    %1451 = vmatpush.msra.mxu0 0.0
    %1452 = vmatpush.msra.mxu0 0.0
    %1453 = vmatpush.msra.mxu0 0.0
    %1454 = vmatpush.msra.mxu0 0.0
    %1455 = vmatpush.msra.mxu0 0.0
    %1456 = vmatpush.msra.mxu0 0.0
    %1457 = vmatpush.msra.mxu0 0.0
    %1458 = vmatpush.msra.mxu0 0.0
    %1459 = vmatpush.msra.mxu0 0.0
    %1460 = vmatpush.msra.mxu0 0.0
    %1461 = vmatpush.msra.mxu0 0.0
    %1462 = vmatpush.msra.mxu0 %v1403
    %1463 = vmatpush.msra.mxu0 %v1401
    %1464 = vmatpush.msra.mxu0 %v1399
    %1465 = vmatpush.msra.mxu0 %v1397
    %1466 = vmatmul.f32.gmra.mxu0 %v1407
    %v1467 = vpop.f32.mrf.mxu0
    %1468 = vmatmul.f32.gmra.mxu0 %v1328
    %v1469 = vpop.f32.mrf.mxu0
    %1470 = vmatmul.f32.gmra.mxu0 %v1265
    %v1471 = vpop.f32.mrf.mxu0
    %1472 = vmatmul.f32.gmra.mxu0 %v1202
    %v1473 = vpop.f32.mrf.mxu0
    %1474 = vmatmul.f32.gmra.mxu0 %v1139
    %v1475 = vpop.f32.mrf.mxu0
    %1476 = vmatmul.f32.gmra.mxu0 %v1076
    %v1477 = vpop.f32.mrf.mxu0
    %1478 = vmatmul.f32.gmra.mxu0 %v1013
    %v1479 = vpop.f32.mrf.mxu0
    %1480 = vmatmul.f32.gmra.mxu0 %v950
    %v1481 = vpop.f32.mrf.mxu0
    %v1482 = vadd.f32 0.0, %v1481
    %1483 = vdwg.mxu0
    %1485 = vrot.lane.b32.xlu0 %v884, 32
    %v1486 = vpop.permute.xlu0 %1485
    %v1487 = vsel %vm272, %v1486, 0
    %1489 = vmatpush.msra.mxu0 0.0
    %1490 = vmatpush.msra.mxu0 0.0
    %1491 = vmatpush.msra.mxu0 0.0
    %1492 = vmatpush.msra.mxu0 0.0
    %1493 = vmatpush.msra.mxu0 0.0
    %1494 = vmatpush.msra.mxu0 0.0
    %1495 = vmatpush.msra.mxu0 0.0
    %1496 = vmatpush.msra.mxu0 0.0
    %1497 = vmatpush.msra.mxu0 0.0
    %1498 = vmatpush.msra.mxu0 0.0
    %1499 = vmatpush.msra.mxu0 0.0
    %1500 = vmatpush.msra.mxu0 0.0
    %1501 = vmatpush.msra.mxu0 %v1394
    %1502 = vmatpush.msra.mxu0 %v1392
    %1503 = vmatpush.msra.mxu0 %v1390
    %1504 = vmatpush.msra.mxu0 %v1388
    %1505 = vmatmul.f32.gmra.mxu0 %v447
    %v1506 = vpop.f32.mrf.mxu0
    %v1507 = vadd.f32 %v1427, %v1506
    %1508 = vmatmul.f32.gmra.mxu0 %v510
    %v1509 = vpop.f32.mrf.mxu0
    %v1510 = vadd.f32 %v1430, %v1509
    %1511 = vmatmul.f32.gmra.mxu0 %v573
    %v1512 = vpop.f32.mrf.mxu0
    %v1513 = vadd.f32 %v1433, %v1512
    %1514 = vmatmul.f32.gmra.mxu0 %v636
    %v1515 = vpop.f32.mrf.mxu0
    %v1516 = vadd.f32 %v1436, %v1515
    %1517 = vmatmul.f32.gmra.mxu0 %v699
    %v1518 = vpop.f32.mrf.mxu0
    %v1519 = vadd.f32 %v1439, %v1518
    %1520 = vmatmul.f32.gmra.mxu0 %v762
    %v1521 = vpop.f32.mrf.mxu0
    %v1522 = vadd.f32 %v1442, %v1521
    %1523 = vmatmul.f32.gmra.mxu0 %v825
    %v1524 = vpop.f32.mrf.mxu0
    %v1525 = vadd.f32 %v1445, %v1524
    %1526 = vmatmul.f32.gmra.mxu0 %v1487
    %v1527 = vpop.f32.mrf.mxu0
    %v1528 = vadd.f32 %v1448, %v1527
    %1529 = vdwg.mxu0
    %1530 = vmatpush.msra.mxu0 0.0
    %1531 = vmatpush.msra.mxu0 0.0
    %1532 = vmatpush.msra.mxu0 0.0
    %1533 = vmatpush.msra.mxu0 0.0
    %1534 = vmatpush.msra.mxu0 0.0
    %1535 = vmatpush.msra.mxu0 0.0
    %1536 = vmatpush.msra.mxu0 0.0
    %1537 = vmatpush.msra.mxu0 0.0
    %1538 = vmatpush.msra.mxu0 0.0
    %1539 = vmatpush.msra.mxu0 0.0
    %1540 = vmatpush.msra.mxu0 0.0
    %1541 = vmatpush.msra.mxu0 0.0
    %1542 = vmatpush.msra.mxu0 %v1395
    %1543 = vmatpush.msra.mxu0 %v1393
    %1544 = vmatpush.msra.mxu0 %v1391
    %1545 = vmatpush.msra.mxu0 %v1389
    %1546 = vmatmul.f32.gmra.mxu0 %v447
    %v1547 = vpop.f32.mrf.mxu0
    %1548 = vmatmul.f32.gmra.mxu0 %v510
    %v1549 = vpop.f32.mrf.mxu0
    %1550 = vmatmul.f32.gmra.mxu0 %v573
    %v1551 = vpop.f32.mrf.mxu0
    %1552 = vmatmul.f32.gmra.mxu0 %v636
    %v1553 = vpop.f32.mrf.mxu0
    %1554 = vmatmul.f32.gmra.mxu0 %v699
    %v1555 = vpop.f32.mrf.mxu0
    %1556 = vmatmul.f32.gmra.mxu0 %v762
    %v1557 = vpop.f32.mrf.mxu0
    %1558 = vmatmul.f32.gmra.mxu0 %v825
    %v1559 = vpop.f32.mrf.mxu0
    %1560 = vmatmul.f32.gmra.mxu0 %v1487
    %v1561 = vpop.f32.mrf.mxu0
    %v1562 = vadd.f32 %v1482, %v1561
    %1563 = vdwg.mxu0
    %v1564 = vld [vmem:[%s8] sm:$0x3]
    %v1566 = vperm.slane %v1564, 0
    %v1567 = vperm.slane %v1564, 1
    %v1570 = vadd.f32 %v1507, %v1566
    %v1571 = vadd.f32 %v1510, %v1566
    %v1572 = vadd.f32 %v1513, %v1566
    %v1573 = vadd.f32 %v1516, %v1566
    %v1574 = vadd.f32 %v1519, %v1566
    %v1575 = vadd.f32 %v1522, %v1566
    %v1576 = vadd.f32 %v1525, %v1566
    %v1577 = vadd.f32 %v1528, %v1566
    %v1578 = vadd.f32 %v1562, %v1567
    %v1579 = vld [vmem:[#allocation7] sm:$0xff]
    %v1580 = vld [vmem:[#allocation7 + $0x8] sm:$0xff]
    %v1581 = vld [vmem:[#allocation7 + $0x10] sm:$0xff]
    %v1582 = vld [vmem:[#allocation7 + $0x18] sm:$0xff]
    %1583 = vmatpush.msra.mxu0 0.0
    %1584 = vmatpush.msra.mxu0 0.0
    %1585 = vmatpush.msra.mxu0 0.0
    %1586 = vmatpush.msra.mxu0 0.0
    %1587 = vmatpush.msra.mxu0 0.0
    %1588 = vmatpush.msra.mxu0 0.0
    %1589 = vmatpush.msra.mxu0 0.0
    %1590 = vmatpush.msra.mxu0 0.0
    %1591 = vmatpush.msra.mxu0 0.0
    %1592 = vmatpush.msra.mxu0 0.0
    %1593 = vmatpush.msra.mxu0 0.0
    %1594 = vmatpush.msra.mxu0 0.0
    %1595 = vmatpush.msra.mxu0 %v1582
    %1596 = vmatpush.msra.mxu0 %v1581
    %1597 = vmatpush.msra.mxu0 %v1580
    %1598 = vmatpush.msra.mxu0 %v1579
    %1599 = vmatmul.f32.gmra.mxu0 %v384
    %v1600 = vpop.f32.mrf.mxu0
    %v1601 = vadd.f32 0.0, %v1600
    %1602 = vdwg.mxu0
    %v1603 = vadd.f32 %v1570, %v1601
    %v1604 = vxor.u32 %v1603, 2147483648
    %v1605 = vmul.f32 %v1604, 1.442695
    %v1606 = vpow.pop %v1605
    %v1607 = vadd.f32 %v1606, 1.0
    %v1608 = vrcp.pop %v1607
    %v1609 = vmul.f32 %v1607, %v1608
    %v1610 = vsub.f32 1.0, %v1609
    %v1611 = vmul.f32 %v1608, %v1610
    %v1612 = vadd.f32 %v1608, %v1611
    %vm1613 = vweird.f32 %v1607
    %vm1614 = vweird.f32 %v1608
    %vm1615 = vmor %vm1613, %vm1614
    %v1616 = vsel %vm1615, %v1608, %v1612
    %v1617 = vand.u32 2147483647, %v1607
    %vm1618 = vcmp.eq.f32.partialorder %v1617, 8.507059e+37
    %v1619 = vand.u32 %v1607, 2147483648
    %v1620 = vor.u32 1.1754944e-38, %v1619
    %v1621 = vsel %vm1618, %v1620, %v1616
    %v1622 = vmul.f32 1.0, %v1621
    %v1623 = vtanh.pop %v1603
    %v1624 = vmul.f32 %v1622, 0.0
    %1626 = vrot.lane.b32.xlu0 %v1623, 64
    %v1627 = vpop.permute.xlu0 %1626
    %v1629 = vmul.f32 %v1622, %v1627
    %1631 = vrot.lane.b32.xlu0 %v1629, 32
    %v1632 = vpop.permute.xlu0 %1631
    %v1634 = vadd.f32 %v1624, %v1632
    %v1635 = vtanh.pop %v1634
    %1637 = vrot.lane.b32.xlu0 %v1635, 64
    %v1638 = vpop.permute.xlu0 %1637
    %v1640 = vmul.f32 %v1622, %v1638
    %1642 = vrot.lane.b32.xlu0 %v1640, 32
    %v1643 = vpop.permute.xlu0 %1642
    %v1644 = vsel %vm272, %v1643, 0
    %1646 = vmatpush.msra.mxu0 0.0
    %1647 = vmatpush.msra.mxu0 0.0
    %1648 = vmatpush.msra.mxu0 0.0
    %1649 = vmatpush.msra.mxu0 0.0
    %1650 = vmatpush.msra.mxu0 0.0
    %1651 = vmatpush.msra.mxu0 0.0
    %1652 = vmatpush.msra.mxu0 0.0
    %1653 = vmatpush.msra.mxu0 0.0
    %1654 = vmatpush.msra.mxu0 0.0
    %1655 = vmatpush.msra.mxu0 0.0
    %1656 = vmatpush.msra.mxu0 0.0
    %1657 = vmatpush.msra.mxu0 0.0
    %1658 = vmatpush.msra.mxu0 %v1582
    %1659 = vmatpush.msra.mxu0 %v1581
    %1660 = vmatpush.msra.mxu0 %v1580
    %1661 = vmatpush.msra.mxu0 %v1579
    %1662 = vmatmul.f32.gmra.mxu0 %v1644
    %v1663 = vpop.f32.mrf.mxu0
    %v1664 = vadd.f32 0.0, %v1663
    %1665 = vdwg.mxu0
    %v1666 = vadd.f32 %v1571, %v1664
    %v1667 = vxor.u32 %v1666, 2147483648
    %v1668 = vmul.f32 %v1667, 1.442695
    %v1669 = vpow.pop %v1668
    %v1670 = vadd.f32 %v1669, 1.0
    %v1671 = vrcp.pop %v1670
    %v1672 = vmul.f32 %v1670, %v1671
    %v1673 = vsub.f32 1.0, %v1672
    %v1674 = vmul.f32 %v1671, %v1673
    %v1675 = vadd.f32 %v1671, %v1674
    %vm1676 = vweird.f32 %v1670
    %vm1677 = vweird.f32 %v1671
    %vm1678 = vmor %vm1676, %vm1677
    %v1679 = vsel %vm1678, %v1671, %v1675
    %v1680 = vand.u32 2147483647, %v1670
    %vm1681 = vcmp.eq.f32.partialorder %v1680, 8.507059e+37
    %v1682 = vand.u32 %v1670, 2147483648
    %v1683 = vor.u32 1.1754944e-38, %v1682
    %v1684 = vsel %vm1681, %v1683, %v1679
    %v1685 = vmul.f32 1.0, %v1684
    %v1686 = vtanh.pop %v1666
    %v1687 = vmul.f32 %v1685, %v1634
    %1689 = vrot.lane.b32.xlu0 %v1686, 64
    %v1690 = vpop.permute.xlu0 %1689
    %v1692 = vmul.f32 %v1685, %v1690
    %1694 = vrot.lane.b32.xlu0 %v1692, 32
    %v1695 = vpop.permute.xlu0 %1694
    %v1697 = vadd.f32 %v1687, %v1695
    %v1698 = vtanh.pop %v1697
    %1700 = vrot.lane.b32.xlu0 %v1698, 64
    %v1701 = vpop.permute.xlu0 %1700
    %v1703 = vmul.f32 %v1685, %v1701
    %1705 = vrot.lane.b32.xlu0 %v1703, 32
    %v1706 = vpop.permute.xlu0 %1705
    %v1707 = vsel %vm272, %v1706, 0
    %1709 = vmatpush.msra.mxu0 0.0
    %1710 = vmatpush.msra.mxu0 0.0
    %1711 = vmatpush.msra.mxu0 0.0
    %1712 = vmatpush.msra.mxu0 0.0
    %1713 = vmatpush.msra.mxu0 0.0
    %1714 = vmatpush.msra.mxu0 0.0
    %1715 = vmatpush.msra.mxu0 0.0
    %1716 = vmatpush.msra.mxu0 0.0
    %1717 = vmatpush.msra.mxu0 0.0
    %1718 = vmatpush.msra.mxu0 0.0
    %1719 = vmatpush.msra.mxu0 0.0
    %1720 = vmatpush.msra.mxu0 0.0
    %1721 = vmatpush.msra.mxu0 %v1582
    %1722 = vmatpush.msra.mxu0 %v1581
    %1723 = vmatpush.msra.mxu0 %v1580
    %1724 = vmatpush.msra.mxu0 %v1579
    %1725 = vmatmul.f32.gmra.mxu0 %v1707
    %v1726 = vpop.f32.mrf.mxu0
    %v1727 = vadd.f32 0.0, %v1726
    %1728 = vdwg.mxu0
    %v1729 = vadd.f32 %v1572, %v1727
    %v1730 = vxor.u32 %v1729, 2147483648
    %v1731 = vmul.f32 %v1730, 1.442695
    %v1732 = vpow.pop %v1731
    %v1733 = vadd.f32 %v1732, 1.0
    %v1734 = vrcp.pop %v1733
    %v1735 = vmul.f32 %v1733, %v1734
    %v1736 = vsub.f32 1.0, %v1735
    %v1737 = vmul.f32 %v1734, %v1736
    %v1738 = vadd.f32 %v1734, %v1737
    %vm1739 = vweird.f32 %v1733
    %vm1740 = vweird.f32 %v1734
    %vm1741 = vmor %vm1739, %vm1740
    %v1742 = vsel %vm1741, %v1734, %v1738
    %v1743 = vand.u32 2147483647, %v1733
    %vm1744 = vcmp.eq.f32.partialorder %v1743, 8.507059e+37
    %v1745 = vand.u32 %v1733, 2147483648
    %v1746 = vor.u32 1.1754944e-38, %v1745
    %v1747 = vsel %vm1744, %v1746, %v1742
    %v1748 = vmul.f32 1.0, %v1747
    %v1749 = vtanh.pop %v1729
    %v1750 = vmul.f32 %v1748, %v1697
    %1752 = vrot.lane.b32.xlu0 %v1749, 64
    %v1753 = vpop.permute.xlu0 %1752
    %v1755 = vmul.f32 %v1748, %v1753
    %1757 = vrot.lane.b32.xlu0 %v1755, 32
    %v1758 = vpop.permute.xlu0 %1757
    %v1760 = vadd.f32 %v1750, %v1758
    %v1761 = vtanh.pop %v1760
    %1763 = vrot.lane.b32.xlu0 %v1761, 64
    %v1764 = vpop.permute.xlu0 %1763
    %v1766 = vmul.f32 %v1748, %v1764
    %1768 = vrot.lane.b32.xlu0 %v1766, 32
    %v1769 = vpop.permute.xlu0 %1768
    %v1770 = vsel %vm272, %v1769, 0
    %1772 = vmatpush.msra.mxu0 0.0
    %1773 = vmatpush.msra.mxu0 0.0
    %1774 = vmatpush.msra.mxu0 0.0
    %1775 = vmatpush.msra.mxu0 0.0
    %1776 = vmatpush.msra.mxu0 0.0
    %1777 = vmatpush.msra.mxu0 0.0
    %1778 = vmatpush.msra.mxu0 0.0
    %1779 = vmatpush.msra.mxu0 0.0
    %1780 = vmatpush.msra.mxu0 0.0
    %1781 = vmatpush.msra.mxu0 0.0
    %1782 = vmatpush.msra.mxu0 0.0
    %1783 = vmatpush.msra.mxu0 0.0
    %1784 = vmatpush.msra.mxu0 %v1582
    %1785 = vmatpush.msra.mxu0 %v1581
    %1786 = vmatpush.msra.mxu0 %v1580
    %1787 = vmatpush.msra.mxu0 %v1579
    %1788 = vmatmul.f32.gmra.mxu0 %v1770
    %v1789 = vpop.f32.mrf.mxu0
    %v1790 = vadd.f32 0.0, %v1789
    %1791 = vdwg.mxu0
    %v1792 = vadd.f32 %v1573, %v1790
    %v1793 = vxor.u32 %v1792, 2147483648
    %v1794 = vmul.f32 %v1793, 1.442695
    %v1795 = vpow.pop %v1794
    %v1796 = vadd.f32 %v1795, 1.0
    %v1797 = vrcp.pop %v1796
    %v1798 = vmul.f32 %v1796, %v1797
    %v1799 = vsub.f32 1.0, %v1798
    %v1800 = vmul.f32 %v1797, %v1799
    %v1801 = vadd.f32 %v1797, %v1800
    %vm1802 = vweird.f32 %v1796
    %vm1803 = vweird.f32 %v1797
    %vm1804 = vmor %vm1802, %vm1803
    %v1805 = vsel %vm1804, %v1797, %v1801
    %v1806 = vand.u32 2147483647, %v1796
    %vm1807 = vcmp.eq.f32.partialorder %v1806, 8.507059e+37
    %v1808 = vand.u32 %v1796, 2147483648
    %v1809 = vor.u32 1.1754944e-38, %v1808
    %v1810 = vsel %vm1807, %v1809, %v1805
    %v1811 = vmul.f32 1.0, %v1810
    %v1812 = vtanh.pop %v1792
    %v1813 = vmul.f32 %v1811, %v1760
    %1815 = vrot.lane.b32.xlu0 %v1812, 64
    %v1816 = vpop.permute.xlu0 %1815
    %v1818 = vmul.f32 %v1811, %v1816
    %1820 = vrot.lane.b32.xlu0 %v1818, 32
    %v1821 = vpop.permute.xlu0 %1820
    %v1823 = vadd.f32 %v1813, %v1821
    %v1824 = vtanh.pop %v1823
    %1826 = vrot.lane.b32.xlu0 %v1824, 64
    %v1827 = vpop.permute.xlu0 %1826
    %v1829 = vmul.f32 %v1811, %v1827
    %1831 = vrot.lane.b32.xlu0 %v1829, 32
    %v1832 = vpop.permute.xlu0 %1831
    %v1833 = vsel %vm272, %v1832, 0
    %1835 = vmatpush.msra.mxu0 0.0
    %1836 = vmatpush.msra.mxu0 0.0
    %1837 = vmatpush.msra.mxu0 0.0
    %1838 = vmatpush.msra.mxu0 0.0
    %1839 = vmatpush.msra.mxu0 0.0
    %1840 = vmatpush.msra.mxu0 0.0
    %1841 = vmatpush.msra.mxu0 0.0
    %1842 = vmatpush.msra.mxu0 0.0
    %1843 = vmatpush.msra.mxu0 0.0
    %1844 = vmatpush.msra.mxu0 0.0
    %1845 = vmatpush.msra.mxu0 0.0
    %1846 = vmatpush.msra.mxu0 0.0
    %1847 = vmatpush.msra.mxu0 %v1582
    %1848 = vmatpush.msra.mxu0 %v1581
    %1849 = vmatpush.msra.mxu0 %v1580
    %1850 = vmatpush.msra.mxu0 %v1579
    %1851 = vmatmul.f32.gmra.mxu0 %v1833
    %v1852 = vpop.f32.mrf.mxu0
    %v1853 = vadd.f32 0.0, %v1852
    %1854 = vdwg.mxu0
    %v1855 = vadd.f32 %v1574, %v1853
    %v1856 = vxor.u32 %v1855, 2147483648
    %v1857 = vmul.f32 %v1856, 1.442695
    %v1858 = vpow.pop %v1857
    %v1859 = vadd.f32 %v1858, 1.0
    %v1860 = vrcp.pop %v1859
    %v1861 = vmul.f32 %v1859, %v1860
    %v1862 = vsub.f32 1.0, %v1861
    %v1863 = vmul.f32 %v1860, %v1862
    %v1864 = vadd.f32 %v1860, %v1863
    %vm1865 = vweird.f32 %v1859
    %vm1866 = vweird.f32 %v1860
    %vm1867 = vmor %vm1865, %vm1866
    %v1868 = vsel %vm1867, %v1860, %v1864
    %v1869 = vand.u32 2147483647, %v1859
    %vm1870 = vcmp.eq.f32.partialorder %v1869, 8.507059e+37
    %v1871 = vand.u32 %v1859, 2147483648
    %v1872 = vor.u32 1.1754944e-38, %v1871
    %v1873 = vsel %vm1870, %v1872, %v1868
    %v1874 = vmul.f32 1.0, %v1873
    %v1875 = vtanh.pop %v1855
    %v1876 = vmul.f32 %v1874, %v1823
    %1878 = vrot.lane.b32.xlu0 %v1875, 64
    %v1879 = vpop.permute.xlu0 %1878
    %v1881 = vmul.f32 %v1874, %v1879
    %1883 = vrot.lane.b32.xlu0 %v1881, 32
    %v1884 = vpop.permute.xlu0 %1883
    %v1886 = vadd.f32 %v1876, %v1884
    %v1887 = vtanh.pop %v1886
    %1889 = vrot.lane.b32.xlu0 %v1887, 64
    %v1890 = vpop.permute.xlu0 %1889
    %v1892 = vmul.f32 %v1874, %v1890
    %1894 = vrot.lane.b32.xlu0 %v1892, 32
    %v1895 = vpop.permute.xlu0 %1894
    %v1896 = vsel %vm272, %v1895, 0
    %1898 = vmatpush.msra.mxu0 0.0
    %1899 = vmatpush.msra.mxu0 0.0
    %1900 = vmatpush.msra.mxu0 0.0
    %1901 = vmatpush.msra.mxu0 0.0
    %1902 = vmatpush.msra.mxu0 0.0
    %1903 = vmatpush.msra.mxu0 0.0
    %1904 = vmatpush.msra.mxu0 0.0
    %1905 = vmatpush.msra.mxu0 0.0
    %1906 = vmatpush.msra.mxu0 0.0
    %1907 = vmatpush.msra.mxu0 0.0
    %1908 = vmatpush.msra.mxu0 0.0
    %1909 = vmatpush.msra.mxu0 0.0
    %1910 = vmatpush.msra.mxu0 %v1582
    %1911 = vmatpush.msra.mxu0 %v1581
    %1912 = vmatpush.msra.mxu0 %v1580
    %1913 = vmatpush.msra.mxu0 %v1579
    %1914 = vmatmul.f32.gmra.mxu0 %v1896
    %v1915 = vpop.f32.mrf.mxu0
    %v1916 = vadd.f32 0.0, %v1915
    %1917 = vdwg.mxu0
    %v1918 = vadd.f32 %v1575, %v1916
    %v1919 = vxor.u32 %v1918, 2147483648
    %v1920 = vmul.f32 %v1919, 1.442695
    %v1921 = vpow.pop %v1920
    %v1922 = vadd.f32 %v1921, 1.0
    %v1923 = vrcp.pop %v1922
    %v1924 = vmul.f32 %v1922, %v1923
    %v1925 = vsub.f32 1.0, %v1924
    %v1926 = vmul.f32 %v1923, %v1925
    %v1927 = vadd.f32 %v1923, %v1926
    %vm1928 = vweird.f32 %v1922
    %vm1929 = vweird.f32 %v1923
    %vm1930 = vmor %vm1928, %vm1929
    %v1931 = vsel %vm1930, %v1923, %v1927
    %v1932 = vand.u32 2147483647, %v1922
    %vm1933 = vcmp.eq.f32.partialorder %v1932, 8.507059e+37
    %v1934 = vand.u32 %v1922, 2147483648
    %v1935 = vor.u32 1.1754944e-38, %v1934
    %v1936 = vsel %vm1933, %v1935, %v1931
    %v1937 = vmul.f32 1.0, %v1936
    %v1938 = vtanh.pop %v1918
    %v1939 = vmul.f32 %v1937, %v1886
    %1941 = vrot.lane.b32.xlu0 %v1938, 64
    %v1942 = vpop.permute.xlu0 %1941
    %v1944 = vmul.f32 %v1937, %v1942
    %1946 = vrot.lane.b32.xlu0 %v1944, 32
    %v1947 = vpop.permute.xlu0 %1946
    %v1949 = vadd.f32 %v1939, %v1947
    %v1950 = vtanh.pop %v1949
    %1952 = vrot.lane.b32.xlu0 %v1950, 64
    %v1953 = vpop.permute.xlu0 %1952
    %v1955 = vmul.f32 %v1937, %v1953
    %1957 = vrot.lane.b32.xlu0 %v1955, 32
    %v1958 = vpop.permute.xlu0 %1957
    %v1959 = vsel %vm272, %v1958, 0
    %1961 = vmatpush.msra.mxu0 0.0
    %1962 = vmatpush.msra.mxu0 0.0
    %1963 = vmatpush.msra.mxu0 0.0
    %1964 = vmatpush.msra.mxu0 0.0
    %1965 = vmatpush.msra.mxu0 0.0
    %1966 = vmatpush.msra.mxu0 0.0
    %1967 = vmatpush.msra.mxu0 0.0
    %1968 = vmatpush.msra.mxu0 0.0
    %1969 = vmatpush.msra.mxu0 0.0
    %1970 = vmatpush.msra.mxu0 0.0
    %1971 = vmatpush.msra.mxu0 0.0
    %1972 = vmatpush.msra.mxu0 0.0
    %1973 = vmatpush.msra.mxu0 %v1582
    %1974 = vmatpush.msra.mxu0 %v1581
    %1975 = vmatpush.msra.mxu0 %v1580
    %1976 = vmatpush.msra.mxu0 %v1579
    %1977 = vmatmul.f32.gmra.mxu0 %v1959
    %v1978 = vpop.f32.mrf.mxu0
    %v1979 = vadd.f32 0.0, %v1978
    %1980 = vdwg.mxu0
    %v1981 = vadd.f32 %v1576, %v1979
    %v1982 = vxor.u32 %v1981, 2147483648
    %v1983 = vmul.f32 %v1982, 1.442695
    %v1984 = vpow.pop %v1983
    %v1985 = vadd.f32 %v1984, 1.0
    %v1986 = vrcp.pop %v1985
    %v1987 = vmul.f32 %v1985, %v1986
    %v1988 = vsub.f32 1.0, %v1987
    %v1989 = vmul.f32 %v1986, %v1988
    %v1990 = vadd.f32 %v1986, %v1989
    %vm1991 = vweird.f32 %v1985
    %vm1992 = vweird.f32 %v1986
    %vm1993 = vmor %vm1991, %vm1992
    %v1994 = vsel %vm1993, %v1986, %v1990
    %v1995 = vand.u32 2147483647, %v1985
    %vm1996 = vcmp.eq.f32.partialorder %v1995, 8.507059e+37
    %v1997 = vand.u32 %v1985, 2147483648
    %v1998 = vor.u32 1.1754944e-38, %v1997
    %v1999 = vsel %vm1996, %v1998, %v1994
    %v2000 = vmul.f32 1.0, %v1999
    %v2001 = vtanh.pop %v1981
    %v2002 = vmul.f32 %v2000, %v1949
    %2004 = vrot.lane.b32.xlu0 %v2001, 64
    %v2005 = vpop.permute.xlu0 %2004
    %v2007 = vmul.f32 %v2000, %v2005
    %2009 = vrot.lane.b32.xlu0 %v2007, 32
    %v2010 = vpop.permute.xlu0 %2009
    %v2012 = vadd.f32 %v2002, %v2010
    %v2013 = vtanh.pop %v2012
    %2015 = vrot.lane.b32.xlu0 %v2013, 64
    %v2016 = vpop.permute.xlu0 %2015
    %v2018 = vmul.f32 %v2000, %v2016
    %2020 = vrot.lane.b32.xlu0 %v2018, 32
    %v2021 = vpop.permute.xlu0 %2020
    %v2022 = vsel %vm272, %v2021, 0
    %2024 = vmatpush.msra.mxu0 0.0
    %2025 = vmatpush.msra.mxu0 0.0
    %2026 = vmatpush.msra.mxu0 0.0
    %2027 = vmatpush.msra.mxu0 0.0
    %2028 = vmatpush.msra.mxu0 0.0
    %2029 = vmatpush.msra.mxu0 0.0
    %2030 = vmatpush.msra.mxu0 0.0
    %2031 = vmatpush.msra.mxu0 0.0
    %2032 = vmatpush.msra.mxu0 0.0
    %2033 = vmatpush.msra.mxu0 0.0
    %2034 = vmatpush.msra.mxu0 0.0
    %2035 = vmatpush.msra.mxu0 0.0
    %2036 = vmatpush.msra.mxu0 %v1582
    %2037 = vmatpush.msra.mxu0 %v1581
    %2038 = vmatpush.msra.mxu0 %v1580
    %2039 = vmatpush.msra.mxu0 %v1579
    %2040 = vmatmul.f32.gmra.mxu0 %v2022
    %v2041 = vpop.f32.mrf.mxu0
    %v2042 = vadd.f32 0.0, %v2041
    %2043 = vdwg.mxu0
    %v2044 = vadd.f32 %v1577, %v2042
    %v2045 = vxor.u32 %v2044, 2147483648
    %v2046 = vmul.f32 %v2045, 1.442695
    %v2047 = vpow.pop %v2046
    %v2048 = vadd.f32 %v2047, 1.0
    %v2049 = vrcp.pop %v2048
    %v2050 = vmul.f32 %v2048, %v2049
    %v2051 = vsub.f32 1.0, %v2050
    %v2052 = vmul.f32 %v2049, %v2051
    %v2053 = vadd.f32 %v2049, %v2052
    %vm2054 = vweird.f32 %v2048
    %vm2055 = vweird.f32 %v2049
    %vm2056 = vmor %vm2054, %vm2055
    %v2057 = vsel %vm2056, %v2049, %v2053
    %v2058 = vand.u32 2147483647, %v2048
    %vm2059 = vcmp.eq.f32.partialorder %v2058, 8.507059e+37
    %v2060 = vand.u32 %v2048, 2147483648
    %v2061 = vor.u32 1.1754944e-38, %v2060
    %v2062 = vsel %vm2059, %v2061, %v2057
    %v2063 = vmul.f32 1.0, %v2062
    %v2064 = vtanh.pop %v2044
    %v2065 = vmul.f32 %v2063, %v2012
    %2067 = vrot.lane.b32.xlu0 %v2064, 64
    %v2068 = vpop.permute.xlu0 %2067
    %v2070 = vmul.f32 %v2063, %v2068
    %2072 = vrot.lane.b32.xlu0 %v2070, 32
    %v2073 = vpop.permute.xlu0 %2072
    %v2075 = vadd.f32 %v2065, %v2073
    %v2076 = vtanh.pop %v2075
    %2078 = vrot.lane.b32.xlu0 %v2076, 64
    %v2079 = vpop.permute.xlu0 %2078
    %v2081 = vmul.f32 %v2063, %v2079
    %v2082 = vxor.u32 %v1578, 2147483648
    %v2083 = vmul.f32 %v2082, 1.442695
    %v2084 = vpow.pop %v2083
    %v2085 = vadd.f32 %v2084, 1.0
    %v2086 = vrcp.pop %v2085
    %v2087 = vmul.f32 %v2085, %v2086
    %v2088 = vsub.f32 1.0, %v2087
    %v2089 = vmul.f32 %v2086, %v2088
    %v2090 = vadd.f32 %v2086, %v2089
    %vm2091 = vweird.f32 %v2085
    %vm2092 = vweird.f32 %v2086
    %vm2093 = vmor %vm2091, %vm2092
    %v2094 = vsel %vm2093, %v2086, %v2090
    %v2095 = vand.u32 2147483647, %v2085
    %vm2096 = vcmp.eq.f32.partialorder %v2095, 8.507059e+37
    %v2097 = vand.u32 %v2085, 2147483648
    %v2098 = vor.u32 1.1754944e-38, %v2097
    %v2099 = vsel %vm2096, %v2098, %v2094
    %v2100 = vmul.f32 1.0, %v2099
    %v2101 = vtanh.pop %v1578
    %2103 = vrot.lane.b32.xlu0 %v2101, 64
    %v2104 = vpop.permute.xlu0 %2103
    %v2106 = vmul.f32 %v2100, %v2104
    %v2107 = vtanh.pop %v2106
    %2109 = vrot.lane.b32.xlu0 %v2107, 96
    %v2110 = vpop.permute.xlu0 %2109
    %v2112 = vmul.f32 %v2100, %v2110
    %v2113 = vld [vmem:[#allocation8] sm:$0xff]
    %v2114 = vld [vmem:[#allocation8 + $0x8] sm:$0xff]
    %v2115 = vld [vmem:[#allocation8 + $0x10] sm:$0xff]
    %v2116 = vld [vmem:[#allocation8 + $0x18] sm:$0xff]
    %v2117 = vld [vmem:[#allocation8 + $0x20] sm:$0xff]
    %v2118 = vld [vmem:[#allocation8 + $0x28] sm:$0xff]
    %v2119 = vld [vmem:[#allocation8 + $0x30] sm:$0xff]
    %v2120 = vld [vmem:[#allocation8 + $0x38] sm:$0xff]
    %2122 = vrot.lane.b32.xlu0 %v2112, 32
    %v2123 = vpop.permute.xlu0 %2122
    %v2124 = vsel %vm272, %v2123, 0
    %2126 = vmatpush.msra.mxu0 0.0
    %2127 = vmatpush.msra.mxu0 0.0
    %2128 = vmatpush.msra.mxu0 0.0
    %2129 = vmatpush.msra.mxu0 0.0
    %2130 = vmatpush.msra.mxu0 0.0
    %2131 = vmatpush.msra.mxu0 0.0
    %2132 = vmatpush.msra.mxu0 0.0
    %2133 = vmatpush.msra.mxu0 0.0
    %2134 = vmatpush.msra.mxu0 0.0
    %2135 = vmatpush.msra.mxu0 0.0
    %2136 = vmatpush.msra.mxu0 0.0
    %2137 = vmatpush.msra.mxu0 0.0
    %2138 = vmatpush.msra.mxu0 %v2120
    %2139 = vmatpush.msra.mxu0 %v2119
    %2140 = vmatpush.msra.mxu0 %v2118
    %2141 = vmatpush.msra.mxu0 %v2117
    %2142 = vmatmul.f32.gmra.mxu0 %v2124
    %v2143 = vpop.f32.mrf.mxu0
    %v2144 = vadd.f32 0.0, %v2143
    %2145 = vdwg.mxu0
    %2147 = vrot.lane.b32.xlu0 %v2081, 32
    %v2148 = vpop.permute.xlu0 %2147
    %v2149 = vsel %vm272, %v2148, 0
    %2151 = vmatpush.msra.mxu0 0.0
    %2152 = vmatpush.msra.mxu0 0.0
    %2153 = vmatpush.msra.mxu0 0.0
    %2154 = vmatpush.msra.mxu0 0.0
    %2155 = vmatpush.msra.mxu0 0.0
    %2156 = vmatpush.msra.mxu0 0.0
    %2157 = vmatpush.msra.mxu0 0.0
    %2158 = vmatpush.msra.mxu0 0.0
    %2159 = vmatpush.msra.mxu0 0.0
    %2160 = vmatpush.msra.mxu0 0.0
    %2161 = vmatpush.msra.mxu0 0.0
    %2162 = vmatpush.msra.mxu0 0.0
    %2163 = vmatpush.msra.mxu0 %v2116
    %2164 = vmatpush.msra.mxu0 %v2115
    %2165 = vmatpush.msra.mxu0 %v2114
    %2166 = vmatpush.msra.mxu0 %v2113
    %2167 = vmatmul.f32.gmra.mxu0 %v2149
    %v2168 = vpop.f32.mrf.mxu0
    %v2169 = vadd.f32 %v2144, %v2168
    %2170 = vdwg.mxu0
    %v2171 = vld [vmem:[%s11] sm:$0x1]
    %v2173 = vperm.slane %v2171, 0
    %v2175 = vadd.f32 %v2169, %v2173
    %v2176 = vmax.f32 %v2175, 0.0
    %v2177 = vld [vmem:[#allocation10] sm:$0xff]
    %v2178 = vld [vmem:[#allocation10 + $0x8] sm:$0xff]
    %v2179 = vld [vmem:[#allocation10 + $0x10] sm:$0xff]
    %v2180 = vld [vmem:[#allocation10 + $0x18] sm:$0xff]
    %v2181 = vld [vmem:[#allocation10 + $0x20] sm:$0xff]
    %v2182 = vld [vmem:[#allocation10 + $0x28] sm:$0xff]
    %v2183 = vld [vmem:[#allocation10 + $0x30] sm:$0xff]
    %v2184 = vld [vmem:[#allocation10 + $0x38] sm:$0xff]
    %v2185 = vld [vmem:[%s13] sm:$0x1]
    %v2187 = vperm.slane %v2185, 0
    %v2190 = vsel %vm192, %v2176, 0
    %2192 = vmatpush.msra.mxu0 0.0
    %2193 = vmatpush.msra.mxu0 0.0
    %2194 = vmatpush.msra.mxu0 0.0
    %2195 = vmatpush.msra.mxu0 0.0
    %2196 = vmatpush.msra.mxu0 0.0
    %2197 = vmatpush.msra.mxu0 0.0
    %2198 = vmatpush.msra.mxu0 0.0
    %2199 = vmatpush.msra.mxu0 0.0
    %2200 = vmatpush.msra.mxu0 %v2184
    %2201 = vmatpush.msra.mxu0 %v2183
    %2202 = vmatpush.msra.mxu0 %v2182
    %2203 = vmatpush.msra.mxu0 %v2181
    %2204 = vmatpush.msra.mxu0 %v2180
    %2205 = vmatpush.msra.mxu0 %v2179
    %2206 = vmatpush.msra.mxu0 %v2178
    %2207 = vmatpush.msra.mxu0 %v2177
    %2208 = vmatmul.f32.gmra.mxu0 %v2190
    %v2209 = vpop.f32.mrf.mxu0
    %v2210 = vadd.f32 %v2187, %v2209
    %2211 = vdwg.mxu0
    %vm2212 = vcmask 517120
    %2213 = vst.msk [vmem:[#allocation11] sm:$0x3] %vm2212, %v2210
    // Predicated region
    $region78: #{leonard_bilstm_forward.1} parent=1 // pred_check
      _
    $region79: #{leonard_bilstm_forward.1} parent=1 // pred_check_branch
      %2215 = sbr.rel (0) target = $region81
    $region80: #{leonard_bilstm_forward.1} parent=1 // pred_region
      %2217 = vsyncadd [#allocation4], 0
      %s2219 = sshll.u32 [#allocation11], 4
      %s2220 = int_to_ptr.vmem [resolvable:$true] %s2219
      %s2221 = sshll.u32 %s14, 4
      %s2222 = int_to_ptr.hbm [resolvable:$true] %s2221
      %2224 = dma.vmem_to_hbm [thread:$0]  %s2220, 32, %s2222, [#allocation4]
    $region81: #{leonard_bilstm_forward.1} parent=1 // pred_fallthru
      _
    // Predicated region
    $region82: #{leonard_bilstm_forward.1} parent=1 // pred_check
      _
    $region83: #{leonard_bilstm_forward.1} parent=1 // pred_check_branch
      %2226 = sbr.rel (0) target = $region85
    $region84: #{leonard_bilstm_forward.1} parent=1 // pred_region
      %2228 = dma.done [#allocation4], 32
    $region85: #{leonard_bilstm_forward.1} parent=1 // pred_fallthru
      _
    %2229 = vsyncpa [#allocation3], 1
    %2230 = vsyncpa [#allocation6], 1
    %2231 = vsyncpa [#allocation9], 1
    %2232 = vsyncpa [#allocation4], 1

</llo_original>
